<compile_context>
chip_gen: v7x
topology: tpu7x:2x2x1
jax: 0.10.0
libtpu: 0.0.40
codegen_flags: <defaults>
</compile_context>

<pallas_src>
import jax
import jax.numpy as jnp
from jax.experimental import pallas as pl
from jax.experimental.pallas import tpu as pltpu

# ---- model hyper-parameters (small, consistent with the module) -------------
B = 2            # batch
S = 8            # seq_length
H = 32           # hidden_dim
NUM_HEADS = 4
HEAD_DIM = H // NUM_HEADS
MLP_DIM = 64
NUM_LAYERS = 2
EPS = 1e-6       # partial(nn.LayerNorm, eps=1e-06)
BS = B * S       # flattened (batch * seq) rows
INV_SQRT2 = 0.7071067811865476
NEG_INF = -1e30
# dropout = attention_dropout = 0.0  -> all dropout layers are exact identities.

PARAM_ORDER = ("ln1_w", "ln1_b", "wqkv", "bqkv", "wo", "bo",
               "ln2_w", "ln2_b", "w1", "b1", "w2", "b2")


# ------------------------------- kernel --------------------------------------
def _layernorm(x, w, b):
    mu = jnp.mean(x, axis=-1, keepdims=True)
    var = jnp.mean(jnp.square(x - mu), axis=-1, keepdims=True)
    return (x - mu) * jax.lax.rsqrt(var + EPS) * w + b


def encoder_fwd_kernel(x_ref, pos_ref, mask_ref,
                       ln1_w_ref, ln1_b_ref,
                       wqkv_ref, bqkv_ref, wo_ref, bo_ref,
                       ln2_w_ref, ln2_b_ref,
                       w1_ref, b1_ref, w2_ref, b2_ref,
                       lnf_w_ref, lnf_b_ref,
                       o_ref):
    f32 = jnp.float32
    bf16 = jnp.bfloat16

    # input + pos_embedding  (Encoder.dropout with p=0 is identity)
    x = x_ref[...].astype(f32) + pos_ref[...].astype(f32)            # (B*S, H)

    for l in range(NUM_LAYERS):                                      # static unroll over layers
        m = mask_ref[l]                                              # (B*S, B*S) additive mask, f32

        # ---- ln_1 -> fused-QKV multi-head self-attention -> (+ residual) ------
        h = _layernorm(x, ln1_w_ref[l], ln1_b_ref[l])                # f32
        # single fused in-projection: (16,32) @ (32,96) bf16 -> f32 accumulate
        qkv = jnp.dot(h.astype(bf16), wqkv_ref[l],
                      preferred_element_type=f32) + bqkv_ref[l]      # (B*S, 3H)

        pv_heads = []
        for hd in range(NUM_HEADS):                                  # static unroll; heads independent
            # per-head q/k/v are static 8-lane slices (scale already folded into Wq)
            q = qkv[:, 0 * H + hd * HEAD_DIM: 0 * H + (hd + 1) * HEAD_DIM]
            k = qkv[:, 1 * H + hd * HEAD_DIM: 1 * H + (hd + 1) * HEAD_DIM]
            v = qkv[:, 2 * H + hd * HEAD_DIM: 2 * H + (hd + 1) * HEAD_DIM]
            # scores over the flattened batch; block-diagonal mask kills cross-batch terms
            s = jax.lax.dot_general(q.astype(bf16), k.astype(bf16),
                                    (((1,), (1,)), ((), ())),
                                    preferred_element_type=f32) + m  # (B*S, B*S)
            s = s - jnp.max(s, axis=-1, keepdims=True)               # stable softmax
            p = jnp.exp(s)
            p = p / jnp.sum(p, axis=-1, keepdims=True)               # exact normalization
            pv_heads.append(jnp.dot(p.astype(bf16), v.astype(bf16),
                                    preferred_element_type=f32))     # (B*S, HEAD_DIM)

        # lane-concat all heads and fold through ONE output-projection dot
        attn_cat = jnp.concatenate(pv_heads, axis=1)                 # (B*S, H)
        attn = jnp.dot(attn_cat.astype(bf16), wo_ref[l],
                       preferred_element_type=f32) + bo_ref[l]
        x = x + attn                                                 # dropout(p=0) + residual

        # ---- ln_2 -> MLP (Linear -> GELU(exact) -> Linear) -> (+ residual) ----
        y = _layernorm(x, ln2_w_ref[l], ln2_b_ref[l])
        y = jnp.dot(y.astype(bf16), w1_ref[l], preferred_element_type=f32) + b1_ref[l]
        # nn.GELU() default is the exact erf form.
        y = 0.5 * y * (1.0 + jax.lax.erf(y * f32(INV_SQRT2)))
        y = jnp.dot(y.astype(bf16), w2_ref[l], preferred_element_type=f32) + b2_ref[l]
        x = x + y

    # ---- final encoder LayerNorm ---------------------------------------------
    o_ref[...] = _layernorm(x, lnf_w_ref[...], lnf_b_ref[...]).astype(o_ref.dtype)


# ------------------------------ wrapper ----------------------------------------
def _build_masks(mask):
    """Per-layer (B*S, B*S) additive masks for the batch-flattened attention.

    mask: (1, S) float additive attn mask.  Encoder.forward repeats it to (S, S)
    (all rows identical) and passes it only to the FIRST layer.  Cross-batch
    attention is disabled with a large negative constant on all layers.
    """
    tok = jnp.arange(BS)
    b_idx = tok // S                      # batch index of each flattened row/col
    t_idx = tok % S                       # within-sequence position of each column
    same_batch = b_idx[:, None] == b_idx[None, :]
    neg = jnp.float32(NEG_INF)
    mask0 = jnp.where(same_batch, mask[0, t_idx][None, :].astype(jnp.float32), neg)
    maskN = jnp.where(same_batch, jnp.float32(0.0), neg)
    return jnp.stack([mask0] + [maskN] * (NUM_LAYERS - 1)).astype(jnp.float32)


def _encoder_forward(x, mask, params):
    """x: (B, S, H);  mask: (1, S) float additive attention mask."""
    x_flat = x.reshape(BS, H).astype(jnp.float32)
    pos_full = jnp.tile(params["pos"].reshape(S, H), (B, 1)).astype(jnp.float32)  # (B*S, H)
    masks = _build_masks(mask)
    layer_args = [params["layers"][n] for n in PARAM_ORDER]
    inputs = (x_flat, pos_full, masks, *layer_args, params["ln_w"], params["ln_b"])

    vmem_spec = pl.BlockSpec(memory_space=pltpu.MemorySpace.VMEM)
    out = pl.pallas_call(
        encoder_fwd_kernel,
        out_shape=jax.ShapeDtypeStruct((BS, H), jnp.float32),
        # no grid: whole problem (~50 KB weights + 2 KB activations) is VMEM-resident
        in_specs=[vmem_spec] * len(inputs),
        out_specs=vmem_spec,
    )(*inputs)
    return out.reshape(B, S, H)


encoder_forward = jax.jit(_encoder_forward)


# --------------------------- parameter init -----------------------------------
def _xavier_uniform(key, fan_out, fan_in):
    limit = (6.0 / (fan_in + fan_out)) ** 0.5
    return jax.random.uniform(key, (fan_out, fan_in), jnp.float32, -limit, limit)


def init_layer_params(key):
    ks = jax.random.split(key, 6)
    scale = 1.0 / (HEAD_DIM ** 0.5)
    bf16 = jnp.bfloat16

    # nn.MultiheadAttention: in_proj_weight xavier_uniform_, in_proj_bias zeros.
    wqkv_t = _xavier_uniform(ks[0], 3 * H, H)          # (3H, H), PyTorch (out, in) layout
    bqkv_t = jnp.zeros((3 * H,), jnp.float32)

    # transpose to (H, 3H): columns are [q(32) | k(32) | v(32)], heads contiguous inside each.
    wqkv = wqkv_t.T
    # fold 1/sqrt(head_dim) into the Q columns (zero runtime cost)
    col_scale = jnp.concatenate([jnp.full((H,), scale, jnp.float32),
                                 jnp.ones((2 * H,), jnp.float32)])
    wqkv = wqkv * col_scale[None, :]
    bqkv = (bqkv_t * col_scale).reshape(1, 3 * H)

    wo = _xavier_uniform(ks[1], H, H).T                # out_proj weight, transposed to (in, out)
    bo = jnp.zeros((1, H), jnp.float32)                # out_proj.bias is zero-initialized

    w1 = _xavier_uniform(ks[2], MLP_DIM, H).T          # (H, MLP_DIM)
    b1 = jax.random.normal(ks[3], (1, MLP_DIM), jnp.float32) * 1e-6
    w2 = _xavier_uniform(ks[4], H, MLP_DIM).T          # (MLP_DIM, H)
    b2 = jax.random.normal(ks[5], (1, H), jnp.float32) * 1e-6

    return dict(
        ln1_w=jnp.ones((1, H), jnp.float32), ln1_b=jnp.zeros((1, H), jnp.float32),
        # matmul weights pre-cast to bf16 (MXU operands); biases / LN params stay f32.
        wqkv=wqkv.astype(bf16), bqkv=bqkv,
        wo=wo.astype(bf16), bo=bo,
        ln2_w=jnp.ones((1, H), jnp.float32), ln2_b=jnp.zeros((1, H), jnp.float32),
        w1=w1.astype(bf16), b1=b1, w2=w2.astype(bf16), b2=b2,
    )


def init_encoder_params(key):
    k_pos, *k_layers = jax.random.split(key, NUM_LAYERS + 1)
    per_layer = [init_layer_params(k) for k in k_layers]
    layers = {n: jnp.stack([lp[n] for lp in per_layer]) for n in per_layer[0]}
    return {
        "pos": jax.random.normal(k_pos, (1, S, H), jnp.float32) * 0.02,
        "layers": layers,                              # every weight stacked over layers
        "ln_w": jnp.ones((1, H), jnp.float32),
        "ln_b": jnp.zeros((1, H), jnp.float32),
    }


# ------------------------------- main -----------------------------------------
if __name__ == "__main__":
    key = jax.random.PRNGKey(0)
    k_params, k_x, k_mask = jax.random.split(key, 3)

    params = init_encoder_params(k_params)
    x = jax.random.normal(k_x, (B, S, H), jnp.float32)
    # float additive attn_mask of shape (1, S); Encoder repeats it to (S, S)
    mask = jax.random.normal(k_mask, (1, S), jnp.float32) * 0.1

    out = encoder_forward(x, mask, params)
    out = jax.block_until_ready(out)
    assert out.shape == (B, S, H)
    assert bool(jnp.all(jnp.isfinite(out)))
    # TODO(synk): dropout layers use p=0.0 (identity); stochastic dropout RNG not implemented.
    print("KERNEL_OK")
</pallas_src>

<mosaic_0001>
module attributes {stable_mosaic.version = 11 : i64} {
  func.func @encoder_fwd_kernel(%arg0: memref<16x32xf32, #tpu.memory_space<vmem>>, %arg1: memref<16x32xf32, #tpu.memory_space<vmem>>, %arg2: memref<2x16x16xf32, #tpu.memory_space<vmem>>, %arg3: memref<2x1x32xf32, #tpu.memory_space<vmem>>, %arg4: memref<2x1x32xf32, #tpu.memory_space<vmem>>, %arg5: memref<2x32x96xbf16, #tpu.memory_space<vmem>>, %arg6: memref<2x1x96xf32, #tpu.memory_space<vmem>>, %arg7: memref<2x32x32xbf16, #tpu.memory_space<vmem>>, %arg8: memref<2x1x32xf32, #tpu.memory_space<vmem>>, %arg9: memref<2x1x32xf32, #tpu.memory_space<vmem>>, %arg10: memref<2x1x32xf32, #tpu.memory_space<vmem>>, %arg11: memref<2x32x64xbf16, #tpu.memory_space<vmem>>, %arg12: memref<2x1x64xf32, #tpu.memory_space<vmem>>, %arg13: memref<2x64x32xbf16, #tpu.memory_space<vmem>>, %arg14: memref<2x1x32xf32, #tpu.memory_space<vmem>>, %arg15: memref<1x32xf32, #tpu.memory_space<vmem>>, %arg16: memref<1x32xf32, #tpu.memory_space<vmem>>, %arg17: memref<16x32xf32, #tpu.memory_space<vmem>>) attributes {dimension_semantics = [], scalar_prefetch = 0 : i64, scratch_operands = 0 : i64, tpu.core_type = #tpu.core_type<tc>} {
    %c0 = arith.constant 0 : index
    %c0_0 = arith.constant 0 : index
    %0 = vector.load %arg0[%c0, %c0_0] : memref<16x32xf32, #tpu.memory_space<vmem>>, vector<16x32xf32>
    %c0_1 = arith.constant 0 : index
    %c0_2 = arith.constant 0 : index
    %1 = vector.load %arg1[%c0_1, %c0_2] : memref<16x32xf32, #tpu.memory_space<vmem>>, vector<16x32xf32>
    %2 = arith.addf %0, %1 : vector<16x32xf32>
    %c0_3 = arith.constant 0 : index
    %c0_4 = arith.constant 0 : index
    %c0_5 = arith.constant 0 : index
    %3 = vector.load %arg2[%c0_3, %c0_4, %c0_5] : memref<2x16x16xf32, #tpu.memory_space<vmem>>, vector<1x16x16xf32>
    %4 = vector.shape_cast %3 : vector<1x16x16xf32> to vector<16x16xf32>
    %c0_6 = arith.constant 0 : index
    %c0_7 = arith.constant 0 : index
    %c0_8 = arith.constant 0 : index
    %5 = vector.load %arg3[%c0_6, %c0_7, %c0_8] : memref<2x1x32xf32, #tpu.memory_space<vmem>>, vector<1x1x32xf32>
    %6 = vector.shape_cast %5 : vector<1x1x32xf32> to vector<1x32xf32>
    %c0_9 = arith.constant 0 : index
    %c0_10 = arith.constant 0 : index
    %c0_11 = arith.constant 0 : index
    %7 = vector.load %arg4[%c0_9, %c0_10, %c0_11] : memref<2x1x32xf32, #tpu.memory_space<vmem>>, vector<1x1x32xf32>
    %8 = vector.shape_cast %7 : vector<1x1x32xf32> to vector<1x32xf32>
    %cst = arith.constant dense<0.000000e+00> : vector<16xf32>
    %9 = vector.multi_reduction <add>, %2, %cst [1] : vector<16x32xf32> to vector<16xf32>
    %10 = vector.shape_cast %9 : vector<16xf32> to vector<16x1xf32>
    %cst_12 = arith.constant 3.200000e+01 : f32
    %11 = vector.broadcast %cst_12 : f32 to vector<16x1xf32>
    %12 = arith.divf %10, %11 : vector<16x1xf32>
    %13 = vector.broadcast %12 : vector<16x1xf32> to vector<16x32xf32>
    %14 = arith.subf %2, %13 : vector<16x32xf32>
    %15 = arith.mulf %14, %14 : vector<16x32xf32>
    %cst_13 = arith.constant dense<0.000000e+00> : vector<16xf32>
    %16 = vector.multi_reduction <add>, %15, %cst_13 [1] : vector<16x32xf32> to vector<16xf32>
    %17 = vector.shape_cast %16 : vector<16xf32> to vector<16x1xf32>
    %cst_14 = arith.constant 3.200000e+01 : f32
    %18 = vector.broadcast %cst_14 : f32 to vector<16x1xf32>
    %19 = arith.divf %17, %18 : vector<16x1xf32>
    %20 = vector.broadcast %12 : vector<16x1xf32> to vector<16x32xf32>
    %21 = arith.subf %2, %20 : vector<16x32xf32>
    %cst_15 = arith.constant 9.99999997E-7 : f32
    %22 = vector.broadcast %cst_15 : f32 to vector<16x1xf32>
    %23 = arith.addf %19, %22 : vector<16x1xf32>
    %24 = math.rsqrt %23 : vector<16x1xf32>
    %25 = vector.broadcast %24 : vector<16x1xf32> to vector<16x32xf32>
    %26 = arith.mulf %21, %25 : vector<16x32xf32>
    %27 = vector.broadcast %6 : vector<1x32xf32> to vector<16x32xf32>
    %28 = arith.mulf %26, %27 : vector<16x32xf32>
    %29 = vector.broadcast %8 : vector<1x32xf32> to vector<16x32xf32>
    %30 = arith.addf %28, %29 : vector<16x32xf32>
    %31 = arith.truncf %30 : vector<16x32xf32> to vector<16x32xbf16>
    %c0_16 = arith.constant 0 : index
    %c0_17 = arith.constant 0 : index
    %c0_18 = arith.constant 0 : index
    %32 = vector.load %arg5[%c0_16, %c0_17, %c0_18] : memref<2x32x96xbf16, #tpu.memory_space<vmem>>, vector<1x32x96xbf16>
    %33 = vector.shape_cast %32 : vector<1x32x96xbf16> to vector<32x96xbf16>
    %cst_19 = arith.constant dense<0.000000e+00> : vector<16x96xf32>
    %34 = tpu.matmul %31, %33, %cst_19 {dimension_numbers = #tpu.dot_dimension_numbers<[1], [0], [0], [1], [0, 0, 1, 1], [], []>} : vector<16x32xbf16>, vector<32x96xbf16>, vector<16x96xf32> -> vector<16x96xf32>
    %c0_20 = arith.constant 0 : index
    %c0_21 = arith.constant 0 : index
    %c0_22 = arith.constant 0 : index
    %35 = vector.load %arg6[%c0_20, %c0_21, %c0_22] : memref<2x1x96xf32, #tpu.memory_space<vmem>>, vector<1x1x96xf32>
    %36 = vector.shape_cast %35 : vector<1x1x96xf32> to vector<1x96xf32>
    %37 = vector.broadcast %36 : vector<1x96xf32> to vector<16x96xf32>
    %38 = arith.addf %34, %37 : vector<16x96xf32>
    %39 = vector.extract_strided_slice %38 {offsets = [0, 0], sizes = [16, 8], strides = [1, 1]} : vector<16x96xf32> to vector<16x8xf32>
    %40 = vector.extract_strided_slice %38 {offsets = [0, 32], sizes = [16, 8], strides = [1, 1]} : vector<16x96xf32> to vector<16x8xf32>
    %41 = vector.extract_strided_slice %38 {offsets = [0, 64], sizes = [16, 8], strides = [1, 1]} : vector<16x96xf32> to vector<16x8xf32>
    %42 = arith.truncf %39 : vector<16x8xf32> to vector<16x8xbf16>
    %43 = arith.truncf %40 : vector<16x8xf32> to vector<16x8xbf16>
    %cst_23 = arith.constant dense<0.000000e+00> : vector<16x16xf32>
    %44 = tpu.matmul %42, %43, %cst_23 {dimension_numbers = #tpu.dot_dimension_numbers<[1], [1], [0], [0], [0, 0, 1, 0], [], []>} : vector<16x8xbf16>, vector<16x8xbf16>, vector<16x16xf32> -> vector<16x16xf32>
    %45 = arith.addf %44, %4 : vector<16x16xf32>
    %cst_24 = arith.constant dense<0xFF800000> : vector<16xf32>
    %46 = vector.multi_reduction <maximumf>, %45, %cst_24 [1] : vector<16x16xf32> to vector<16xf32>
    %47 = vector.shape_cast %46 : vector<16xf32> to vector<16x1xf32>
    %48 = vector.broadcast %47 : vector<16x1xf32> to vector<16x16xf32>
    %49 = arith.subf %45, %48 : vector<16x16xf32>
    %50 = math.exp %49 : vector<16x16xf32>
    %cst_25 = arith.constant dense<0.000000e+00> : vector<16xf32>
    %51 = vector.multi_reduction <add>, %50, %cst_25 [1] : vector<16x16xf32> to vector<16xf32>
    %52 = vector.shape_cast %51 : vector<16xf32> to vector<16x1xf32>
    %53 = vector.broadcast %52 : vector<16x1xf32> to vector<16x16xf32>
    %54 = arith.divf %50, %53 : vector<16x16xf32>
    %55 = arith.truncf %54 : vector<16x16xf32> to vector<16x16xbf16>
    %56 = arith.truncf %41 : vector<16x8xf32> to vector<16x8xbf16>
    %cst_26 = arith.constant dense<0.000000e+00> : vector<16x8xf32>
    %57 = tpu.matmul %55, %56, %cst_26 {dimension_numbers = #tpu.dot_dimension_numbers<[1], [0], [0], [1], [0, 0, 1, 1], [], []>} : vector<16x16xbf16>, vector<16x8xbf16>, vector<16x8xf32> -> vector<16x8xf32>
    %58 = vector.extract_strided_slice %38 {offsets = [0, 8], sizes = [16, 8], strides = [1, 1]} : vector<16x96xf32> to vector<16x8xf32>
    %59 = vector.extract_strided_slice %38 {offsets = [0, 40], sizes = [16, 8], strides = [1, 1]} : vector<16x96xf32> to vector<16x8xf32>
    %60 = vector.extract_strided_slice %38 {offsets = [0, 72], sizes = [16, 8], strides = [1, 1]} : vector<16x96xf32> to vector<16x8xf32>
    %61 = arith.truncf %58 : vector<16x8xf32> to vector<16x8xbf16>
    %62 = arith.truncf %59 : vector<16x8xf32> to vector<16x8xbf16>
    %cst_27 = arith.constant dense<0.000000e+00> : vector<16x16xf32>
    %63 = tpu.matmul %61, %62, %cst_27 {dimension_numbers = #tpu.dot_dimension_numbers<[1], [1], [0], [0], [0, 0, 1, 0], [], []>} : vector<16x8xbf16>, vector<16x8xbf16>, vector<16x16xf32> -> vector<16x16xf32>
    %64 = arith.addf %63, %4 : vector<16x16xf32>
    %cst_28 = arith.constant dense<0xFF800000> : vector<16xf32>
    %65 = vector.multi_reduction <maximumf>, %64, %cst_28 [1] : vector<16x16xf32> to vector<16xf32>
    %66 = vector.shape_cast %65 : vector<16xf32> to vector<16x1xf32>
    %67 = vector.broadcast %66 : vector<16x1xf32> to vector<16x16xf32>
    %68 = arith.subf %64, %67 : vector<16x16xf32>
    %69 = math.exp %68 : vector<16x16xf32>
    %cst_29 = arith.constant dense<0.000000e+00> : vector<16xf32>
    %70 = vector.multi_reduction <add>, %69, %cst_29 [1] : vector<16x16xf32> to vector<16xf32>
    %71 = vector.shape_cast %70 : vector<16xf32> to vector<16x1xf32>
    %72 = vector.broadcast %71 : vector<16x1xf32> to vector<16x16xf32>
    %73 = arith.divf %69, %72 : vector<16x16xf32>
    %74 = arith.truncf %73 : vector<16x16xf32> to vector<16x16xbf16>
    %75 = arith.truncf %60 : vector<16x8xf32> to vector<16x8xbf16>
    %cst_30 = arith.constant dense<0.000000e+00> : vector<16x8xf32>
    %76 = tpu.matmul %74, %75, %cst_30 {dimension_numbers = #tpu.dot_dimension_numbers<[1], [0], [0], [1], [0, 0, 1, 1], [], []>} : vector<16x16xbf16>, vector<16x8xbf16>, vector<16x8xf32> -> vector<16x8xf32>
    %77 = vector.extract_strided_slice %38 {offsets = [0, 16], sizes = [16, 8], strides = [1, 1]} : vector<16x96xf32> to vector<16x8xf32>
    %78 = vector.extract_strided_slice %38 {offsets = [0, 48], sizes = [16, 8], strides = [1, 1]} : vector<16x96xf32> to vector<16x8xf32>
    %79 = vector.extract_strided_slice %38 {offsets = [0, 80], sizes = [16, 8], strides = [1, 1]} : vector<16x96xf32> to vector<16x8xf32>
    %80 = arith.truncf %77 : vector<16x8xf32> to vector<16x8xbf16>
    %81 = arith.truncf %78 : vector<16x8xf32> to vector<16x8xbf16>
    %cst_31 = arith.constant dense<0.000000e+00> : vector<16x16xf32>
    %82 = tpu.matmul %80, %81, %cst_31 {dimension_numbers = #tpu.dot_dimension_numbers<[1], [1], [0], [0], [0, 0, 1, 0], [], []>} : vector<16x8xbf16>, vector<16x8xbf16>, vector<16x16xf32> -> vector<16x16xf32>
    %83 = arith.addf %82, %4 : vector<16x16xf32>
    %cst_32 = arith.constant dense<0xFF800000> : vector<16xf32>
    %84 = vector.multi_reduction <maximumf>, %83, %cst_32 [1] : vector<16x16xf32> to vector<16xf32>
    %85 = vector.shape_cast %84 : vector<16xf32> to vector<16x1xf32>
    %86 = vector.broadcast %85 : vector<16x1xf32> to vector<16x16xf32>
    %87 = arith.subf %83, %86 : vector<16x16xf32>
    %88 = math.exp %87 : vector<16x16xf32>
    %cst_33 = arith.constant dense<0.000000e+00> : vector<16xf32>
    %89 = vector.multi_reduction <add>, %88, %cst_33 [1] : vector<16x16xf32> to vector<16xf32>
    %90 = vector.shape_cast %89 : vector<16xf32> to vector<16x1xf32>
    %91 = vector.broadcast %90 : vector<16x1xf32> to vector<16x16xf32>
    %92 = arith.divf %88, %91 : vector<16x16xf32>
    %93 = arith.truncf %92 : vector<16x16xf32> to vector<16x16xbf16>
    %94 = arith.truncf %79 : vector<16x8xf32> to vector<16x8xbf16>
    %cst_34 = arith.constant dense<0.000000e+00> : vector<16x8xf32>
    %95 = tpu.matmul %93, %94, %cst_34 {dimension_numbers = #tpu.dot_dimension_numbers<[1], [0], [0], [1], [0, 0, 1, 1], [], []>} : vector<16x16xbf16>, vector<16x8xbf16>, vector<16x8xf32> -> vector<16x8xf32>
    %96 = vector.extract_strided_slice %38 {offsets = [0, 24], sizes = [16, 8], strides = [1, 1]} : vector<16x96xf32> to vector<16x8xf32>
    %97 = vector.extract_strided_slice %38 {offsets = [0, 56], sizes = [16, 8], strides = [1, 1]} : vector<16x96xf32> to vector<16x8xf32>
    %98 = vector.extract_strided_slice %38 {offsets = [0, 88], sizes = [16, 8], strides = [1, 1]} : vector<16x96xf32> to vector<16x8xf32>
    %99 = arith.truncf %96 : vector<16x8xf32> to vector<16x8xbf16>
    %100 = arith.truncf %97 : vector<16x8xf32> to vector<16x8xbf16>
    %cst_35 = arith.constant dense<0.000000e+00> : vector<16x16xf32>
    %101 = tpu.matmul %99, %100, %cst_35 {dimension_numbers = #tpu.dot_dimension_numbers<[1], [1], [0], [0], [0, 0, 1, 0], [], []>} : vector<16x8xbf16>, vector<16x8xbf16>, vector<16x16xf32> -> vector<16x16xf32>
    %102 = arith.addf %101, %4 : vector<16x16xf32>
    %cst_36 = arith.constant dense<0xFF800000> : vector<16xf32>
    %103 = vector.multi_reduction <maximumf>, %102, %cst_36 [1] : vector<16x16xf32> to vector<16xf32>
    %104 = vector.shape_cast %103 : vector<16xf32> to vector<16x1xf32>
    %105 = vector.broadcast %104 : vector<16x1xf32> to vector<16x16xf32>
    %106 = arith.subf %102, %105 : vector<16x16xf32>
    %107 = math.exp %106 : vector<16x16xf32>
    %cst_37 = arith.constant dense<0.000000e+00> : vector<16xf32>
    %108 = vector.multi_reduction <add>, %107, %cst_37 [1] : vector<16x16xf32> to vector<16xf32>
    %109 = vector.shape_cast %108 : vector<16xf32> to vector<16x1xf32>
    %110 = vector.broadcast %109 : vector<16x1xf32> to vector<16x16xf32>
    %111 = arith.divf %107, %110 : vector<16x16xf32>
    %112 = arith.truncf %111 : vector<16x16xf32> to vector<16x16xbf16>
    %113 = arith.truncf %98 : vector<16x8xf32> to vector<16x8xbf16>
    %cst_38 = arith.constant dense<0.000000e+00> : vector<16x8xf32>
    %114 = tpu.matmul %112, %113, %cst_38 {dimension_numbers = #tpu.dot_dimension_numbers<[1], [0], [0], [1], [0, 0, 1, 1], [], []>} : vector<16x16xbf16>, vector<16x8xbf16>, vector<16x8xf32> -> vector<16x8xf32>
    %115 = tpu.concatenate %57, %76, %95, %114 in 1 : vector<16x8xf32>, vector<16x8xf32>, vector<16x8xf32>, vector<16x8xf32> -> vector<16x32xf32>
    %116 = arith.truncf %115 : vector<16x32xf32> to vector<16x32xbf16>
    %c0_39 = arith.constant 0 : index
    %c0_40 = arith.constant 0 : index
    %c0_41 = arith.constant 0 : index
    %117 = vector.load %arg7[%c0_39, %c0_40, %c0_41] : memref<2x32x32xbf16, #tpu.memory_space<vmem>>, vector<1x32x32xbf16>
    %118 = vector.shape_cast %117 : vector<1x32x32xbf16> to vector<32x32xbf16>
    %cst_42 = arith.constant dense<0.000000e+00> : vector<16x32xf32>
    %119 = tpu.matmul %116, %118, %cst_42 {dimension_numbers = #tpu.dot_dimension_numbers<[1], [0], [0], [1], [0, 0, 1, 1], [], []>} : vector<16x32xbf16>, vector<32x32xbf16>, vector<16x32xf32> -> vector<16x32xf32>
    %c0_43 = arith.constant 0 : index
    %c0_44 = arith.constant 0 : index
    %c0_45 = arith.constant 0 : index
    %120 = vector.load %arg8[%c0_43, %c0_44, %c0_45] : memref<2x1x32xf32, #tpu.memory_space<vmem>>, vector<1x1x32xf32>
    %121 = vector.shape_cast %120 : vector<1x1x32xf32> to vector<1x32xf32>
    %122 = vector.broadcast %121 : vector<1x32xf32> to vector<16x32xf32>
    %123 = arith.addf %119, %122 : vector<16x32xf32>
    %124 = arith.addf %2, %123 : vector<16x32xf32>
    %c0_46 = arith.constant 0 : index
    %c0_47 = arith.constant 0 : index
    %c0_48 = arith.constant 0 : index
    %125 = vector.load %arg9[%c0_46, %c0_47, %c0_48] : memref<2x1x32xf32, #tpu.memory_space<vmem>>, vector<1x1x32xf32>
    %126 = vector.shape_cast %125 : vector<1x1x32xf32> to vector<1x32xf32>
    %c0_49 = arith.constant 0 : index
    %c0_50 = arith.constant 0 : index
    %c0_51 = arith.constant 0 : index
    %127 = vector.load %arg10[%c0_49, %c0_50, %c0_51] : memref<2x1x32xf32, #tpu.memory_space<vmem>>, vector<1x1x32xf32>
    %128 = vector.shape_cast %127 : vector<1x1x32xf32> to vector<1x32xf32>
    %cst_52 = arith.constant dense<0.000000e+00> : vector<16xf32>
    %129 = vector.multi_reduction <add>, %124, %cst_52 [1] : vector<16x32xf32> to vector<16xf32>
    %130 = vector.shape_cast %129 : vector<16xf32> to vector<16x1xf32>
    %cst_53 = arith.constant 3.200000e+01 : f32
    %131 = vector.broadcast %cst_53 : f32 to vector<16x1xf32>
    %132 = arith.divf %130, %131 : vector<16x1xf32>
    %133 = vector.broadcast %132 : vector<16x1xf32> to vector<16x32xf32>
    %134 = arith.subf %124, %133 : vector<16x32xf32>
    %135 = arith.mulf %134, %134 : vector<16x32xf32>
    %cst_54 = arith.constant dense<0.000000e+00> : vector<16xf32>
    %136 = vector.multi_reduction <add>, %135, %cst_54 [1] : vector<16x32xf32> to vector<16xf32>
    %137 = vector.shape_cast %136 : vector<16xf32> to vector<16x1xf32>
    %cst_55 = arith.constant 3.200000e+01 : f32
    %138 = vector.broadcast %cst_55 : f32 to vector<16x1xf32>
    %139 = arith.divf %137, %138 : vector<16x1xf32>
    %140 = vector.broadcast %132 : vector<16x1xf32> to vector<16x32xf32>
    %141 = arith.subf %124, %140 : vector<16x32xf32>
    %cst_56 = arith.constant 9.99999997E-7 : f32
    %142 = vector.broadcast %cst_56 : f32 to vector<16x1xf32>
    %143 = arith.addf %139, %142 : vector<16x1xf32>
    %144 = math.rsqrt %143 : vector<16x1xf32>
    %145 = vector.broadcast %144 : vector<16x1xf32> to vector<16x32xf32>
    %146 = arith.mulf %141, %145 : vector<16x32xf32>
    %147 = vector.broadcast %126 : vector<1x32xf32> to vector<16x32xf32>
    %148 = arith.mulf %146, %147 : vector<16x32xf32>
    %149 = vector.broadcast %128 : vector<1x32xf32> to vector<16x32xf32>
    %150 = arith.addf %148, %149 : vector<16x32xf32>
    %151 = arith.truncf %150 : vector<16x32xf32> to vector<16x32xbf16>
    %c0_57 = arith.constant 0 : index
    %c0_58 = arith.constant 0 : index
    %c0_59 = arith.constant 0 : index
    %152 = vector.load %arg11[%c0_57, %c0_58, %c0_59] : memref<2x32x64xbf16, #tpu.memory_space<vmem>>, vector<1x32x64xbf16>
    %153 = vector.shape_cast %152 : vector<1x32x64xbf16> to vector<32x64xbf16>
    %cst_60 = arith.constant dense<0.000000e+00> : vector<16x64xf32>
    %154 = tpu.matmul %151, %153, %cst_60 {dimension_numbers = #tpu.dot_dimension_numbers<[1], [0], [0], [1], [0, 0, 1, 1], [], []>} : vector<16x32xbf16>, vector<32x64xbf16>, vector<16x64xf32> -> vector<16x64xf32>
    %c0_61 = arith.constant 0 : index
    %c0_62 = arith.constant 0 : index
    %c0_63 = arith.constant 0 : index
    %155 = vector.load %arg12[%c0_61, %c0_62, %c0_63] : memref<2x1x64xf32, #tpu.memory_space<vmem>>, vector<1x1x64xf32>
    %156 = vector.shape_cast %155 : vector<1x1x64xf32> to vector<1x64xf32>
    %157 = vector.broadcast %156 : vector<1x64xf32> to vector<16x64xf32>
    %158 = arith.addf %154, %157 : vector<16x64xf32>
    %cst_64 = arith.constant 5.000000e-01 : f32
    %159 = vector.broadcast %cst_64 : f32 to vector<16x64xf32>
    %160 = arith.mulf %159, %158 : vector<16x64xf32>
    %cst_65 = arith.constant 0.707106769 : f32
    %161 = vector.broadcast %cst_65 : f32 to vector<16x64xf32>
    %162 = arith.mulf %158, %161 : vector<16x64xf32>
    %163 = math.erf %162 : vector<16x64xf32>
    %cst_66 = arith.constant 1.000000e+00 : f32
    %164 = vector.broadcast %cst_66 : f32 to vector<16x64xf32>
    %165 = arith.addf %164, %163 : vector<16x64xf32>
    %166 = arith.mulf %160, %165 : vector<16x64xf32>
    %167 = arith.truncf %166 : vector<16x64xf32> to vector<16x64xbf16>
    %c0_67 = arith.constant 0 : index
    %c0_68 = arith.constant 0 : index
    %c0_69 = arith.constant 0 : index
    %168 = vector.load %arg13[%c0_67, %c0_68, %c0_69] : memref<2x64x32xbf16, #tpu.memory_space<vmem>>, vector<1x64x32xbf16>
    %169 = vector.shape_cast %168 : vector<1x64x32xbf16> to vector<64x32xbf16>
    %cst_70 = arith.constant dense<0.000000e+00> : vector<16x32xf32>
    %170 = tpu.matmul %167, %169, %cst_70 {dimension_numbers = #tpu.dot_dimension_numbers<[1], [0], [0], [1], [0, 0, 1, 1], [], []>} : vector<16x64xbf16>, vector<64x32xbf16>, vector<16x32xf32> -> vector<16x32xf32>
    %c0_71 = arith.constant 0 : index
    %c0_72 = arith.constant 0 : index
    %c0_73 = arith.constant 0 : index
    %171 = vector.load %arg14[%c0_71, %c0_72, %c0_73] : memref<2x1x32xf32, #tpu.memory_space<vmem>>, vector<1x1x32xf32>
    %172 = vector.shape_cast %171 : vector<1x1x32xf32> to vector<1x32xf32>
    %173 = vector.broadcast %172 : vector<1x32xf32> to vector<16x32xf32>
    %174 = arith.addf %170, %173 : vector<16x32xf32>
    %175 = arith.addf %124, %174 : vector<16x32xf32>
    %c1 = arith.constant 1 : index
    %c0_74 = arith.constant 0 : index
    %c0_75 = arith.constant 0 : index
    %176 = vector.load %arg2[%c1, %c0_74, %c0_75] : memref<2x16x16xf32, #tpu.memory_space<vmem>>, vector<1x16x16xf32>
    %177 = vector.shape_cast %176 : vector<1x16x16xf32> to vector<16x16xf32>
    %c1_76 = arith.constant 1 : index
    %c0_77 = arith.constant 0 : index
    %c0_78 = arith.constant 0 : index
    %178 = vector.load %arg3[%c1_76, %c0_77, %c0_78] : memref<2x1x32xf32, #tpu.memory_space<vmem>>, vector<1x1x32xf32>
    %179 = vector.shape_cast %178 : vector<1x1x32xf32> to vector<1x32xf32>
    %c1_79 = arith.constant 1 : index
    %c0_80 = arith.constant 0 : index
    %c0_81 = arith.constant 0 : index
    %180 = vector.load %arg4[%c1_79, %c0_80, %c0_81] : memref<2x1x32xf32, #tpu.memory_space<vmem>>, vector<1x1x32xf32>
    %181 = vector.shape_cast %180 : vector<1x1x32xf32> to vector<1x32xf32>
    %cst_82 = arith.constant dense<0.000000e+00> : vector<16xf32>
    %182 = vector.multi_reduction <add>, %175, %cst_82 [1] : vector<16x32xf32> to vector<16xf32>
    %183 = vector.shape_cast %182 : vector<16xf32> to vector<16x1xf32>
    %cst_83 = arith.constant 3.200000e+01 : f32
    %184 = vector.broadcast %cst_83 : f32 to vector<16x1xf32>
    %185 = arith.divf %183, %184 : vector<16x1xf32>
    %186 = vector.broadcast %185 : vector<16x1xf32> to vector<16x32xf32>
    %187 = arith.subf %175, %186 : vector<16x32xf32>
    %188 = arith.mulf %187, %187 : vector<16x32xf32>
    %cst_84 = arith.constant dense<0.000000e+00> : vector<16xf32>
    %189 = vector.multi_reduction <add>, %188, %cst_84 [1] : vector<16x32xf32> to vector<16xf32>
    %190 = vector.shape_cast %189 : vector<16xf32> to vector<16x1xf32>
    %cst_85 = arith.constant 3.200000e+01 : f32
    %191 = vector.broadcast %cst_85 : f32 to vector<16x1xf32>
    %192 = arith.divf %190, %191 : vector<16x1xf32>
    %193 = vector.broadcast %185 : vector<16x1xf32> to vector<16x32xf32>
    %194 = arith.subf %175, %193 : vector<16x32xf32>
    %cst_86 = arith.constant 9.99999997E-7 : f32
    %195 = vector.broadcast %cst_86 : f32 to vector<16x1xf32>
    %196 = arith.addf %192, %195 : vector<16x1xf32>
    %197 = math.rsqrt %196 : vector<16x1xf32>
    %198 = vector.broadcast %197 : vector<16x1xf32> to vector<16x32xf32>
    %199 = arith.mulf %194, %198 : vector<16x32xf32>
    %200 = vector.broadcast %179 : vector<1x32xf32> to vector<16x32xf32>
    %201 = arith.mulf %199, %200 : vector<16x32xf32>
    %202 = vector.broadcast %181 : vector<1x32xf32> to vector<16x32xf32>
    %203 = arith.addf %201, %202 : vector<16x32xf32>
    %204 = arith.truncf %203 : vector<16x32xf32> to vector<16x32xbf16>
    %c1_87 = arith.constant 1 : index
    %c0_88 = arith.constant 0 : index
    %c0_89 = arith.constant 0 : index
    %205 = vector.load %arg5[%c1_87, %c0_88, %c0_89] : memref<2x32x96xbf16, #tpu.memory_space<vmem>>, vector<1x32x96xbf16>
    %206 = vector.shape_cast %205 : vector<1x32x96xbf16> to vector<32x96xbf16>
    %cst_90 = arith.constant dense<0.000000e+00> : vector<16x96xf32>
    %207 = tpu.matmul %204, %206, %cst_90 {dimension_numbers = #tpu.dot_dimension_numbers<[1], [0], [0], [1], [0, 0, 1, 1], [], []>} : vector<16x32xbf16>, vector<32x96xbf16>, vector<16x96xf32> -> vector<16x96xf32>
    %c1_91 = arith.constant 1 : index
    %c0_92 = arith.constant 0 : index
    %c0_93 = arith.constant 0 : index
    %208 = vector.load %arg6[%c1_91, %c0_92, %c0_93] : memref<2x1x96xf32, #tpu.memory_space<vmem>>, vector<1x1x96xf32>
    %209 = vector.shape_cast %208 : vector<1x1x96xf32> to vector<1x96xf32>
    %210 = vector.broadcast %209 : vector<1x96xf32> to vector<16x96xf32>
    %211 = arith.addf %207, %210 : vector<16x96xf32>
    %212 = vector.extract_strided_slice %211 {offsets = [0, 0], sizes = [16, 8], strides = [1, 1]} : vector<16x96xf32> to vector<16x8xf32>
    %213 = vector.extract_strided_slice %211 {offsets = [0, 32], sizes = [16, 8], strides = [1, 1]} : vector<16x96xf32> to vector<16x8xf32>
    %214 = vector.extract_strided_slice %211 {offsets = [0, 64], sizes = [16, 8], strides = [1, 1]} : vector<16x96xf32> to vector<16x8xf32>
    %215 = arith.truncf %212 : vector<16x8xf32> to vector<16x8xbf16>
    %216 = arith.truncf %213 : vector<16x8xf32> to vector<16x8xbf16>
    %cst_94 = arith.constant dense<0.000000e+00> : vector<16x16xf32>
    %217 = tpu.matmul %215, %216, %cst_94 {dimension_numbers = #tpu.dot_dimension_numbers<[1], [1], [0], [0], [0, 0, 1, 0], [], []>} : vector<16x8xbf16>, vector<16x8xbf16>, vector<16x16xf32> -> vector<16x16xf32>
    %218 = arith.addf %217, %177 : vector<16x16xf32>
    %cst_95 = arith.constant dense<0xFF800000> : vector<16xf32>
    %219 = vector.multi_reduction <maximumf>, %218, %cst_95 [1] : vector<16x16xf32> to vector<16xf32>
    %220 = vector.shape_cast %219 : vector<16xf32> to vector<16x1xf32>
    %221 = vector.broadcast %220 : vector<16x1xf32> to vector<16x16xf32>
    %222 = arith.subf %218, %221 : vector<16x16xf32>
    %223 = math.exp %222 : vector<16x16xf32>
    %cst_96 = arith.constant dense<0.000000e+00> : vector<16xf32>
    %224 = vector.multi_reduction <add>, %223, %cst_96 [1] : vector<16x16xf32> to vector<16xf32>
    %225 = vector.shape_cast %224 : vector<16xf32> to vector<16x1xf32>
    %226 = vector.broadcast %225 : vector<16x1xf32> to vector<16x16xf32>
    %227 = arith.divf %223, %226 : vector<16x16xf32>
    %228 = arith.truncf %227 : vector<16x16xf32> to vector<16x16xbf16>
    %229 = arith.truncf %214 : vector<16x8xf32> to vector<16x8xbf16>
    %cst_97 = arith.constant dense<0.000000e+00> : vector<16x8xf32>
    %230 = tpu.matmul %228, %229, %cst_97 {dimension_numbers = #tpu.dot_dimension_numbers<[1], [0], [0], [1], [0, 0, 1, 1], [], []>} : vector<16x16xbf16>, vector<16x8xbf16>, vector<16x8xf32> -> vector<16x8xf32>
    %231 = vector.extract_strided_slice %211 {offsets = [0, 8], sizes = [16, 8], strides = [1, 1]} : vector<16x96xf32> to vector<16x8xf32>
    %232 = vector.extract_strided_slice %211 {offsets = [0, 40], sizes = [16, 8], strides = [1, 1]} : vector<16x96xf32> to vector<16x8xf32>
    %233 = vector.extract_strided_slice %211 {offsets = [0, 72], sizes = [16, 8], strides = [1, 1]} : vector<16x96xf32> to vector<16x8xf32>
    %234 = arith.truncf %231 : vector<16x8xf32> to vector<16x8xbf16>
    %235 = arith.truncf %232 : vector<16x8xf32> to vector<16x8xbf16>
    %cst_98 = arith.constant dense<0.000000e+00> : vector<16x16xf32>
    %236 = tpu.matmul %234, %235, %cst_98 {dimension_numbers = #tpu.dot_dimension_numbers<[1], [1], [0], [0], [0, 0, 1, 0], [], []>} : vector<16x8xbf16>, vector<16x8xbf16>, vector<16x16xf32> -> vector<16x16xf32>
    %237 = arith.addf %236, %177 : vector<16x16xf32>
    %cst_99 = arith.constant dense<0xFF800000> : vector<16xf32>
    %238 = vector.multi_reduction <maximumf>, %237, %cst_99 [1] : vector<16x16xf32> to vector<16xf32>
    %239 = vector.shape_cast %238 : vector<16xf32> to vector<16x1xf32>
    %240 = vector.broadcast %239 : vector<16x1xf32> to vector<16x16xf32>
    %241 = arith.subf %237, %240 : vector<16x16xf32>
    %242 = math.exp %241 : vector<16x16xf32>
    %cst_100 = arith.constant dense<0.000000e+00> : vector<16xf32>
    %243 = vector.multi_reduction <add>, %242, %cst_100 [1] : vector<16x16xf32> to vector<16xf32>
    %244 = vector.shape_cast %243 : vector<16xf32> to vector<16x1xf32>
    %245 = vector.broadcast %244 : vector<16x1xf32> to vector<16x16xf32>
    %246 = arith.divf %242, %245 : vector<16x16xf32>
    %247 = arith.truncf %246 : vector<16x16xf32> to vector<16x16xbf16>
    %248 = arith.truncf %233 : vector<16x8xf32> to vector<16x8xbf16>
    %cst_101 = arith.constant dense<0.000000e+00> : vector<16x8xf32>
    %249 = tpu.matmul %247, %248, %cst_101 {dimension_numbers = #tpu.dot_dimension_numbers<[1], [0], [0], [1], [0, 0, 1, 1], [], []>} : vector<16x16xbf16>, vector<16x8xbf16>, vector<16x8xf32> -> vector<16x8xf32>
    %250 = vector.extract_strided_slice %211 {offsets = [0, 16], sizes = [16, 8], strides = [1, 1]} : vector<16x96xf32> to vector<16x8xf32>
    %251 = vector.extract_strided_slice %211 {offsets = [0, 48], sizes = [16, 8], strides = [1, 1]} : vector<16x96xf32> to vector<16x8xf32>
    %252 = vector.extract_strided_slice %211 {offsets = [0, 80], sizes = [16, 8], strides = [1, 1]} : vector<16x96xf32> to vector<16x8xf32>
    %253 = arith.truncf %250 : vector<16x8xf32> to vector<16x8xbf16>
    %254 = arith.truncf %251 : vector<16x8xf32> to vector<16x8xbf16>
    %cst_102 = arith.constant dense<0.000000e+00> : vector<16x16xf32>
    %255 = tpu.matmul %253, %254, %cst_102 {dimension_numbers = #tpu.dot_dimension_numbers<[1], [1], [0], [0], [0, 0, 1, 0], [], []>} : vector<16x8xbf16>, vector<16x8xbf16>, vector<16x16xf32> -> vector<16x16xf32>
    %256 = arith.addf %255, %177 : vector<16x16xf32>
    %cst_103 = arith.constant dense<0xFF800000> : vector<16xf32>
    %257 = vector.multi_reduction <maximumf>, %256, %cst_103 [1] : vector<16x16xf32> to vector<16xf32>
    %258 = vector.shape_cast %257 : vector<16xf32> to vector<16x1xf32>
    %259 = vector.broadcast %258 : vector<16x1xf32> to vector<16x16xf32>
    %260 = arith.subf %256, %259 : vector<16x16xf32>
    %261 = math.exp %260 : vector<16x16xf32>
    %cst_104 = arith.constant dense<0.000000e+00> : vector<16xf32>
    %262 = vector.multi_reduction <add>, %261, %cst_104 [1] : vector<16x16xf32> to vector<16xf32>
    %263 = vector.shape_cast %262 : vector<16xf32> to vector<16x1xf32>
    %264 = vector.broadcast %263 : vector<16x1xf32> to vector<16x16xf32>
    %265 = arith.divf %261, %264 : vector<16x16xf32>
    %266 = arith.truncf %265 : vector<16x16xf32> to vector<16x16xbf16>
    %267 = arith.truncf %252 : vector<16x8xf32> to vector<16x8xbf16>
    %cst_105 = arith.constant dense<0.000000e+00> : vector<16x8xf32>
    %268 = tpu.matmul %266, %267, %cst_105 {dimension_numbers = #tpu.dot_dimension_numbers<[1], [0], [0], [1], [0, 0, 1, 1], [], []>} : vector<16x16xbf16>, vector<16x8xbf16>, vector<16x8xf32> -> vector<16x8xf32>
    %269 = vector.extract_strided_slice %211 {offsets = [0, 24], sizes = [16, 8], strides = [1, 1]} : vector<16x96xf32> to vector<16x8xf32>
    %270 = vector.extract_strided_slice %211 {offsets = [0, 56], sizes = [16, 8], strides = [1, 1]} : vector<16x96xf32> to vector<16x8xf32>
    %271 = vector.extract_strided_slice %211 {offsets = [0, 88], sizes = [16, 8], strides = [1, 1]} : vector<16x96xf32> to vector<16x8xf32>
    %272 = arith.truncf %269 : vector<16x8xf32> to vector<16x8xbf16>
    %273 = arith.truncf %270 : vector<16x8xf32> to vector<16x8xbf16>
    %cst_106 = arith.constant dense<0.000000e+00> : vector<16x16xf32>
    %274 = tpu.matmul %272, %273, %cst_106 {dimension_numbers = #tpu.dot_dimension_numbers<[1], [1], [0], [0], [0, 0, 1, 0], [], []>} : vector<16x8xbf16>, vector<16x8xbf16>, vector<16x16xf32> -> vector<16x16xf32>
    %275 = arith.addf %274, %177 : vector<16x16xf32>
    %cst_107 = arith.constant dense<0xFF800000> : vector<16xf32>
    %276 = vector.multi_reduction <maximumf>, %275, %cst_107 [1] : vector<16x16xf32> to vector<16xf32>
    %277 = vector.shape_cast %276 : vector<16xf32> to vector<16x1xf32>
    %278 = vector.broadcast %277 : vector<16x1xf32> to vector<16x16xf32>
    %279 = arith.subf %275, %278 : vector<16x16xf32>
    %280 = math.exp %279 : vector<16x16xf32>
    %cst_108 = arith.constant dense<0.000000e+00> : vector<16xf32>
    %281 = vector.multi_reduction <add>, %280, %cst_108 [1] : vector<16x16xf32> to vector<16xf32>
    %282 = vector.shape_cast %281 : vector<16xf32> to vector<16x1xf32>
    %283 = vector.broadcast %282 : vector<16x1xf32> to vector<16x16xf32>
    %284 = arith.divf %280, %283 : vector<16x16xf32>
    %285 = arith.truncf %284 : vector<16x16xf32> to vector<16x16xbf16>
    %286 = arith.truncf %271 : vector<16x8xf32> to vector<16x8xbf16>
    %cst_109 = arith.constant dense<0.000000e+00> : vector<16x8xf32>
    %287 = tpu.matmul %285, %286, %cst_109 {dimension_numbers = #tpu.dot_dimension_numbers<[1], [0], [0], [1], [0, 0, 1, 1], [], []>} : vector<16x16xbf16>, vector<16x8xbf16>, vector<16x8xf32> -> vector<16x8xf32>
    %288 = tpu.concatenate %230, %249, %268, %287 in 1 : vector<16x8xf32>, vector<16x8xf32>, vector<16x8xf32>, vector<16x8xf32> -> vector<16x32xf32>
    %289 = arith.truncf %288 : vector<16x32xf32> to vector<16x32xbf16>
    %c1_110 = arith.constant 1 : index
    %c0_111 = arith.constant 0 : index
    %c0_112 = arith.constant 0 : index
    %290 = vector.load %arg7[%c1_110, %c0_111, %c0_112] : memref<2x32x32xbf16, #tpu.memory_space<vmem>>, vector<1x32x32xbf16>
    %291 = vector.shape_cast %290 : vector<1x32x32xbf16> to vector<32x32xbf16>
    %cst_113 = arith.constant dense<0.000000e+00> : vector<16x32xf32>
    %292 = tpu.matmul %289, %291, %cst_113 {dimension_numbers = #tpu.dot_dimension_numbers<[1], [0], [0], [1], [0, 0, 1, 1], [], []>} : vector<16x32xbf16>, vector<32x32xbf16>, vector<16x32xf32> -> vector<16x32xf32>
    %c1_114 = arith.constant 1 : index
    %c0_115 = arith.constant 0 : index
    %c0_116 = arith.constant 0 : index
    %293 = vector.load %arg8[%c1_114, %c0_115, %c0_116] : memref<2x1x32xf32, #tpu.memory_space<vmem>>, vector<1x1x32xf32>
    %294 = vector.shape_cast %293 : vector<1x1x32xf32> to vector<1x32xf32>
    %295 = vector.broadcast %294 : vector<1x32xf32> to vector<16x32xf32>
    %296 = arith.addf %292, %295 : vector<16x32xf32>
    %297 = arith.addf %175, %296 : vector<16x32xf32>
    %c1_117 = arith.constant 1 : index
    %c0_118 = arith.constant 0 : index
    %c0_119 = arith.constant 0 : index
    %298 = vector.load %arg9[%c1_117, %c0_118, %c0_119] : memref<2x1x32xf32, #tpu.memory_space<vmem>>, vector<1x1x32xf32>
    %299 = vector.shape_cast %298 : vector<1x1x32xf32> to vector<1x32xf32>
    %c1_120 = arith.constant 1 : index
    %c0_121 = arith.constant 0 : index
    %c0_122 = arith.constant 0 : index
    %300 = vector.load %arg10[%c1_120, %c0_121, %c0_122] : memref<2x1x32xf32, #tpu.memory_space<vmem>>, vector<1x1x32xf32>
    %301 = vector.shape_cast %300 : vector<1x1x32xf32> to vector<1x32xf32>
    %cst_123 = arith.constant dense<0.000000e+00> : vector<16xf32>
    %302 = vector.multi_reduction <add>, %297, %cst_123 [1] : vector<16x32xf32> to vector<16xf32>
    %303 = vector.shape_cast %302 : vector<16xf32> to vector<16x1xf32>
    %cst_124 = arith.constant 3.200000e+01 : f32
    %304 = vector.broadcast %cst_124 : f32 to vector<16x1xf32>
    %305 = arith.divf %303, %304 : vector<16x1xf32>
    %306 = vector.broadcast %305 : vector<16x1xf32> to vector<16x32xf32>
    %307 = arith.subf %297, %306 : vector<16x32xf32>
    %308 = arith.mulf %307, %307 : vector<16x32xf32>
    %cst_125 = arith.constant dense<0.000000e+00> : vector<16xf32>
    %309 = vector.multi_reduction <add>, %308, %cst_125 [1] : vector<16x32xf32> to vector<16xf32>
    %310 = vector.shape_cast %309 : vector<16xf32> to vector<16x1xf32>
    %cst_126 = arith.constant 3.200000e+01 : f32
    %311 = vector.broadcast %cst_126 : f32 to vector<16x1xf32>
    %312 = arith.divf %310, %311 : vector<16x1xf32>
    %313 = vector.broadcast %305 : vector<16x1xf32> to vector<16x32xf32>
    %314 = arith.subf %297, %313 : vector<16x32xf32>
    %cst_127 = arith.constant 9.99999997E-7 : f32
    %315 = vector.broadcast %cst_127 : f32 to vector<16x1xf32>
    %316 = arith.addf %312, %315 : vector<16x1xf32>
    %317 = math.rsqrt %316 : vector<16x1xf32>
    %318 = vector.broadcast %317 : vector<16x1xf32> to vector<16x32xf32>
    %319 = arith.mulf %314, %318 : vector<16x32xf32>
    %320 = vector.broadcast %299 : vector<1x32xf32> to vector<16x32xf32>
    %321 = arith.mulf %319, %320 : vector<16x32xf32>
    %322 = vector.broadcast %301 : vector<1x32xf32> to vector<16x32xf32>
    %323 = arith.addf %321, %322 : vector<16x32xf32>
    %324 = arith.truncf %323 : vector<16x32xf32> to vector<16x32xbf16>
    %c1_128 = arith.constant 1 : index
    %c0_129 = arith.constant 0 : index
    %c0_130 = arith.constant 0 : index
    %325 = vector.load %arg11[%c1_128, %c0_129, %c0_130] : memref<2x32x64xbf16, #tpu.memory_space<vmem>>, vector<1x32x64xbf16>
    %326 = vector.shape_cast %325 : vector<1x32x64xbf16> to vector<32x64xbf16>
    %cst_131 = arith.constant dense<0.000000e+00> : vector<16x64xf32>
    %327 = tpu.matmul %324, %326, %cst_131 {dimension_numbers = #tpu.dot_dimension_numbers<[1], [0], [0], [1], [0, 0, 1, 1], [], []>} : vector<16x32xbf16>, vector<32x64xbf16>, vector<16x64xf32> -> vector<16x64xf32>
    %c1_132 = arith.constant 1 : index
    %c0_133 = arith.constant 0 : index
    %c0_134 = arith.constant 0 : index
    %328 = vector.load %arg12[%c1_132, %c0_133, %c0_134] : memref<2x1x64xf32, #tpu.memory_space<vmem>>, vector<1x1x64xf32>
    %329 = vector.shape_cast %328 : vector<1x1x64xf32> to vector<1x64xf32>
    %330 = vector.broadcast %329 : vector<1x64xf32> to vector<16x64xf32>
    %331 = arith.addf %327, %330 : vector<16x64xf32>
    %cst_135 = arith.constant 5.000000e-01 : f32
    %332 = vector.broadcast %cst_135 : f32 to vector<16x64xf32>
    %333 = arith.mulf %332, %331 : vector<16x64xf32>
    %cst_136 = arith.constant 0.707106769 : f32
    %334 = vector.broadcast %cst_136 : f32 to vector<16x64xf32>
    %335 = arith.mulf %331, %334 : vector<16x64xf32>
    %336 = math.erf %335 : vector<16x64xf32>
    %cst_137 = arith.constant 1.000000e+00 : f32
    %337 = vector.broadcast %cst_137 : f32 to vector<16x64xf32>
    %338 = arith.addf %337, %336 : vector<16x64xf32>
    %339 = arith.mulf %333, %338 : vector<16x64xf32>
    %340 = arith.truncf %339 : vector<16x64xf32> to vector<16x64xbf16>
    %c1_138 = arith.constant 1 : index
    %c0_139 = arith.constant 0 : index
    %c0_140 = arith.constant 0 : index
    %341 = vector.load %arg13[%c1_138, %c0_139, %c0_140] : memref<2x64x32xbf16, #tpu.memory_space<vmem>>, vector<1x64x32xbf16>
    %342 = vector.shape_cast %341 : vector<1x64x32xbf16> to vector<64x32xbf16>
    %cst_141 = arith.constant dense<0.000000e+00> : vector<16x32xf32>
    %343 = tpu.matmul %340, %342, %cst_141 {dimension_numbers = #tpu.dot_dimension_numbers<[1], [0], [0], [1], [0, 0, 1, 1], [], []>} : vector<16x64xbf16>, vector<64x32xbf16>, vector<16x32xf32> -> vector<16x32xf32>
    %c1_142 = arith.constant 1 : index
    %c0_143 = arith.constant 0 : index
    %c0_144 = arith.constant 0 : index
    %344 = vector.load %arg14[%c1_142, %c0_143, %c0_144] : memref<2x1x32xf32, #tpu.memory_space<vmem>>, vector<1x1x32xf32>
    %345 = vector.shape_cast %344 : vector<1x1x32xf32> to vector<1x32xf32>
    %346 = vector.broadcast %345 : vector<1x32xf32> to vector<16x32xf32>
    %347 = arith.addf %343, %346 : vector<16x32xf32>
    %348 = arith.addf %297, %347 : vector<16x32xf32>
    %c0_145 = arith.constant 0 : index
    %c0_146 = arith.constant 0 : index
    %349 = vector.load %arg15[%c0_145, %c0_146] : memref<1x32xf32, #tpu.memory_space<vmem>>, vector<1x32xf32>
    %c0_147 = arith.constant 0 : index
    %c0_148 = arith.constant 0 : index
    %350 = vector.load %arg16[%c0_147, %c0_148] : memref<1x32xf32, #tpu.memory_space<vmem>>, vector<1x32xf32>
    %cst_149 = arith.constant dense<0.000000e+00> : vector<16xf32>
    %351 = vector.multi_reduction <add>, %348, %cst_149 [1] : vector<16x32xf32> to vector<16xf32>
    %352 = vector.shape_cast %351 : vector<16xf32> to vector<16x1xf32>
    %cst_150 = arith.constant 3.200000e+01 : f32
    %353 = vector.broadcast %cst_150 : f32 to vector<16x1xf32>
    %354 = arith.divf %352, %353 : vector<16x1xf32>
    %355 = vector.broadcast %354 : vector<16x1xf32> to vector<16x32xf32>
    %356 = arith.subf %348, %355 : vector<16x32xf32>
    %357 = arith.mulf %356, %356 : vector<16x32xf32>
    %cst_151 = arith.constant dense<0.000000e+00> : vector<16xf32>
    %358 = vector.multi_reduction <add>, %357, %cst_151 [1] : vector<16x32xf32> to vector<16xf32>
    %359 = vector.shape_cast %358 : vector<16xf32> to vector<16x1xf32>
    %cst_152 = arith.constant 3.200000e+01 : f32
    %360 = vector.broadcast %cst_152 : f32 to vector<16x1xf32>
    %361 = arith.divf %359, %360 : vector<16x1xf32>
    %362 = vector.broadcast %354 : vector<16x1xf32> to vector<16x32xf32>
    %363 = arith.subf %348, %362 : vector<16x32xf32>
    %cst_153 = arith.constant 9.99999997E-7 : f32
    %364 = vector.broadcast %cst_153 : f32 to vector<16x1xf32>
    %365 = arith.addf %361, %364 : vector<16x1xf32>
    %366 = math.rsqrt %365 : vector<16x1xf32>
    %367 = vector.broadcast %366 : vector<16x1xf32> to vector<16x32xf32>
    %368 = arith.mulf %363, %367 : vector<16x32xf32>
    %369 = vector.broadcast %349 : vector<1x32xf32> to vector<16x32xf32>
    %370 = arith.mulf %368, %369 : vector<16x32xf32>
    %371 = vector.broadcast %350 : vector<1x32xf32> to vector<16x32xf32>
    %372 = arith.addf %370, %371 : vector<16x32xf32>
    %c0_154 = arith.constant 0 : index
    %c0_155 = arith.constant 0 : index
    %373 = vector.load %arg17[%c0_154, %c0_155] : memref<16x32xf32, #tpu.memory_space<vmem>>, vector<16x32xf32>
    tpu.vector_store %arg17[%c0_154, %c0_155], %372 {strides = array<i32>} : memref<16x32xf32, #tpu.memory_space<vmem>>, vector<16x32xf32>,
    return
  }
}

</mosaic_0001>

<llo_original>
// kernel: _encoder_forward.1
$region0: #{_encoder_forward.1}
  #allocation0 [shape = 'u32[]', space=smem, size = 0x4, offset = 0x4, fixed_abs, tag = 'smem constant byte address 0x4 - core index']
  #allocation1 [shape = 'u32[144,128]{1,0:T(1,128)}', space=vmem, size = 0x12000, scoped, tag = 'internal scratch']
  %s0 = inlined_call_operand.vmem [shape: f32[16,32], index: 0, kind: input, shape index: {}]
  %s1 = inlined_call_operand.vmem [shape: f32[16,32], index: 1, kind: input, shape index: {}]
  %s2 = inlined_call_operand.vmem [shape: f32[2,16,16], index: 2, kind: input, shape index: {}]
  %s3 = inlined_call_operand.vmem [shape: f32[2,1,32], index: 3, kind: input, shape index: {}]
  %s4 = inlined_call_operand.vmem [shape: f32[2,1,32], index: 4, kind: input, shape index: {}]
  %s5 = inlined_call_operand.vmem [shape: bf16[2,32,96], index: 5, kind: input, shape index: {}]
  %s6 = inlined_call_operand.vmem [shape: f32[2,1,96], index: 6, kind: input, shape index: {}]
  %s7 = inlined_call_operand.vmem [shape: bf16[2,32,32], index: 7, kind: input, shape index: {}]
  %s8 = inlined_call_operand.vmem [shape: f32[2,1,32], index: 8, kind: input, shape index: {}]
  %s9 = inlined_call_operand.vmem [shape: f32[2,1,32], index: 9, kind: input, shape index: {}]
  %s10 = inlined_call_operand.vmem [shape: f32[2,1,32], index: 10, kind: input, shape index: {}]
  %s11 = inlined_call_operand.vmem [shape: bf16[2,32,64], index: 11, kind: input, shape index: {}]
  %s12 = inlined_call_operand.vmem [shape: f32[2,1,64], index: 12, kind: input, shape index: {}]
  %s13 = inlined_call_operand.vmem [shape: bf16[2,64,32], index: 13, kind: input, shape index: {}]
  %s14 = inlined_call_operand.vmem [shape: f32[2,1,32], index: 14, kind: input, shape index: {}]
  %s15 = inlined_call_operand.vmem [shape: f32[1,32], index: 15, kind: input, shape index: {}]
  %s16 = inlined_call_operand.vmem [shape: f32[1,32], index: 16, kind: input, shape index: {}]
  %s17 = inlined_call_operand.hbm [shape: f32[16,32], index: 17, kind: output, shape index: {}]
  %s18 = sld [smem:[#allocation0]]
  $region78: #{_encoder_forward.1} parent=0
    _
  %s20 = ssub.s32 1, %s18
  %s21 = scalar_select 0, %s20, %s18
  $region1: #{_encoder_forward.1} parent=0
    #allocation2 [shape = 'u8[8192]{0}', space=vmem, size = 0x2000, scoped, tag = 'output window, operand 0, single buffered']
    #allocation3 [shape = 's32[1]{0}', space=sflag, size = 0x4, scoped, tag = 'scoped memory for _encoder_forward.1']
    %22 = vsyncpa [#allocation3], 0
    // Predicated region
    $region2: #{_encoder_forward.1} parent=1 // pred_check
      _
    $region3: #{_encoder_forward.1} parent=1 // pred_check_branch
      %24 = sbr.rel (0) target = $region5
    $region4: #{_encoder_forward.1} parent=1 // pred_region
      _
    $region5: #{_encoder_forward.1} parent=1 // pred_fallthru
      _
    // Predicated region
    $region6: #{_encoder_forward.1} parent=1 // pred_check
      _
    $region7: #{_encoder_forward.1} parent=1 // pred_check_branch
      %26 = sbr.rel (0) target = $region9
    $region8: #{_encoder_forward.1} parent=1 // pred_region
      _
    $region9: #{_encoder_forward.1} parent=1 // pred_fallthru
      _
    // Predicated region
    $region10: #{_encoder_forward.1} parent=1 // pred_check
      _
    $region11: #{_encoder_forward.1} parent=1 // pred_check_branch
      %28 = sbr.rel (0) target = $region13
    $region12: #{_encoder_forward.1} parent=1 // pred_region
      _
    $region13: #{_encoder_forward.1} parent=1 // pred_fallthru
      _
    // Predicated region
    $region14: #{_encoder_forward.1} parent=1 // pred_check
      _
    $region15: #{_encoder_forward.1} parent=1 // pred_check_branch
      %30 = sbr.rel (0) target = $region17
    $region16: #{_encoder_forward.1} parent=1 // pred_region
      _
    $region17: #{_encoder_forward.1} parent=1 // pred_fallthru
      _
    // Predicated region
    $region18: #{_encoder_forward.1} parent=1 // pred_check
      _
    $region19: #{_encoder_forward.1} parent=1 // pred_check_branch
      %32 = sbr.rel (0) target = $region21
    $region20: #{_encoder_forward.1} parent=1 // pred_region
      _
    $region21: #{_encoder_forward.1} parent=1 // pred_fallthru
      _
    // Predicated region
    $region22: #{_encoder_forward.1} parent=1 // pred_check
      _
    $region23: #{_encoder_forward.1} parent=1 // pred_check_branch
      %34 = sbr.rel (0) target = $region25
    $region24: #{_encoder_forward.1} parent=1 // pred_region
      _
    $region25: #{_encoder_forward.1} parent=1 // pred_fallthru
      _
    // Predicated region
    $region26: #{_encoder_forward.1} parent=1 // pred_check
      _
    $region27: #{_encoder_forward.1} parent=1 // pred_check_branch
      %36 = sbr.rel (0) target = $region29
    $region28: #{_encoder_forward.1} parent=1 // pred_region
      _
    $region29: #{_encoder_forward.1} parent=1 // pred_fallthru
      _
    // Predicated region
    $region30: #{_encoder_forward.1} parent=1 // pred_check
      _
    $region31: #{_encoder_forward.1} parent=1 // pred_check_branch
      %38 = sbr.rel (0) target = $region33
    $region32: #{_encoder_forward.1} parent=1 // pred_region
      _
    $region33: #{_encoder_forward.1} parent=1 // pred_fallthru
      _
    // Predicated region
    $region34: #{_encoder_forward.1} parent=1 // pred_check
      _
    $region35: #{_encoder_forward.1} parent=1 // pred_check_branch
      %40 = sbr.rel (0) target = $region37
    $region36: #{_encoder_forward.1} parent=1 // pred_region
      _
    $region37: #{_encoder_forward.1} parent=1 // pred_fallthru
      _
    // Predicated region
    $region38: #{_encoder_forward.1} parent=1 // pred_check
      _
    $region39: #{_encoder_forward.1} parent=1 // pred_check_branch
      %42 = sbr.rel (0) target = $region41
    $region40: #{_encoder_forward.1} parent=1 // pred_region
      _
    $region41: #{_encoder_forward.1} parent=1 // pred_fallthru
      _
    // Predicated region
    $region42: #{_encoder_forward.1} parent=1 // pred_check
      _
    $region43: #{_encoder_forward.1} parent=1 // pred_check_branch
      %44 = sbr.rel (0) target = $region45
    $region44: #{_encoder_forward.1} parent=1 // pred_region
      _
    $region45: #{_encoder_forward.1} parent=1 // pred_fallthru
      _
    // Predicated region
    $region46: #{_encoder_forward.1} parent=1 // pred_check
      _
    $region47: #{_encoder_forward.1} parent=1 // pred_check_branch
      %46 = sbr.rel (0) target = $region49
    $region48: #{_encoder_forward.1} parent=1 // pred_region
      _
    $region49: #{_encoder_forward.1} parent=1 // pred_fallthru
      _
    // Predicated region
    $region50: #{_encoder_forward.1} parent=1 // pred_check
      _
    $region51: #{_encoder_forward.1} parent=1 // pred_check_branch
      %48 = sbr.rel (0) target = $region53
    $region52: #{_encoder_forward.1} parent=1 // pred_region
      _
    $region53: #{_encoder_forward.1} parent=1 // pred_fallthru
      _
    // Predicated region
    $region54: #{_encoder_forward.1} parent=1 // pred_check
      _
    $region55: #{_encoder_forward.1} parent=1 // pred_check_branch
      %50 = sbr.rel (0) target = $region57
    $region56: #{_encoder_forward.1} parent=1 // pred_region
      _
    $region57: #{_encoder_forward.1} parent=1 // pred_fallthru
      _
    // Predicated region
    $region58: #{_encoder_forward.1} parent=1 // pred_check
      _
    $region59: #{_encoder_forward.1} parent=1 // pred_check_branch
      %52 = sbr.rel (0) target = $region61
    $region60: #{_encoder_forward.1} parent=1 // pred_region
      _
    $region61: #{_encoder_forward.1} parent=1 // pred_fallthru
      _
    // Predicated region
    $region62: #{_encoder_forward.1} parent=1 // pred_check
      _
    $region63: #{_encoder_forward.1} parent=1 // pred_check_branch
      %54 = sbr.rel (0) target = $region65
    $region64: #{_encoder_forward.1} parent=1 // pred_region
      _
    $region65: #{_encoder_forward.1} parent=1 // pred_fallthru
      _
    // Predicated region
    $region66: #{_encoder_forward.1} parent=1 // pred_check
      _
    $region67: #{_encoder_forward.1} parent=1 // pred_check_branch
      %56 = sbr.rel (0) target = $region69
    $region68: #{_encoder_forward.1} parent=1 // pred_region
      _
    $region69: #{_encoder_forward.1} parent=1 // pred_fallthru
      _
    %v58 = vld [vmem:[%s0] sm:$0xff]
    %v59 = vld [vmem:[%s0 + $0x8] sm:$0xff]
    %v60 = vld [vmem:[%s1] sm:$0xff]
    %v61 = vld [vmem:[%s1 + $0x8] sm:$0xff]
    %v62 = vadd.f32 %v58, %v60
    %v63 = vadd.f32 %v59, %v61
    %v64 = vld [vmem:[%s2] sm:$0xff]
    %v65 = vld [vmem:[%s2 + $0x8] sm:$0xff]
    %v66 = vld [vmem:[%s3] sm:$0x1]
    %v67 = vld [vmem:[%s4] sm:$0x1]
    %vm68 = vcmask 261120
    %v69 = vsel %vm68, %v62, 0.0
    %70 = vadd.xlane.f32.xlu0 %v69
    %v71 = vpop.xlane.xlu0 %70
    %v72 = vsel %vm68, %v63, 0.0
    %73 = vadd.xlane.f32.xlu0 %v72
    %v74 = vpop.xlane.xlu0 %73
    %v75 = vrcp.pop 32.0
    %v76 = vmul.f32 %v71, %v75
    %v77 = vmul.f32 %v74, %v75
    %v78 = vsub.f32 %v62, %v76
    %v79 = vsub.f32 %v63, %v77
    %v80 = vmul.f32 %v78, %v78
    %v81 = vmul.f32 %v79, %v79
    %v82 = vsel %vm68, %v80, 0.0
    %83 = vadd.xlane.f32.xlu0 %v82
    %v84 = vpop.xlane.xlu0 %83
    %v85 = vsel %vm68, %v81, 0.0
    %86 = vadd.xlane.f32.xlu0 %v85
    %v87 = vpop.xlane.xlu0 %86
    %v88 = vmul.f32 %v84, %v75
    %v89 = vmul.f32 %v87, %v75
    %v90 = vadd.f32 %v88, 1e-06
    %v91 = vadd.f32 %v89, 1e-06
    %v92 = vrsqrt.pop %v90
    %v93 = vrsqrt.pop %v91
    %v94 = vmul.f32 %v78, %v92
    %v95 = vmul.f32 %v79, %v93
    %v97 = vlaneseq
    %v98 = vshrl.u32 %v97, 7
    %v99 = vsub.s32 0, %v98
    %v100 = vrot.slane %v66, %v99
    %v102 = vmul.f32 %v94, %v100
    %v103 = vmul.f32 %v95, %v100
    %v105 = vlaneseq
    %v106 = vshrl.u32 %v105, 7
    %v107 = vsub.s32 0, %v106
    %v108 = vrot.slane %v67, %v107
    %v110 = vadd.f32 %v102, %v108
    %v111 = vadd.f32 %v103, %v108
    %v112 = vpack.c.bf16 %v111, %v110
    %v113 = vld [vmem:[%s5] sm:$0xf]
    %v114 = vld [vmem:[%s5 + $0x4] sm:$0xf]
    %v115 = vld [vmem:[%s5 + $0x8] sm:$0xf]
    %v116 = vld [vmem:[%s5 + $0xc] sm:$0xf]
    %v117 = vld [vmem:[%s6] sm:$0x1]
    %v119 = vlaneseq
    %v120 = vshrl.u32 %v119, 7
    %v121 = vsub.s32 0, %v120
    %v122 = vrot.slane %v117, %v121
    %v128 = vunpack.c.l.b16 %v113
    %v129 = vunpack.c.l.b16 %v114
    %v130 = vunpack.c.l.b16 %v115
    %v131 = vunpack.c.l.b16 %v116
    %v132 = vpack.c.b16 %v129, %v128
    %v133 = vpack.c.b16 %v131, %v130
    %v137 = vsel %vm68, %v112, 0
    %139 = vmatprep.subr.bf16.mxu0 0
    %140 = vmatpush1.bf16.msra.mxu0 %v132
    %141 = vmatprep.subr.bf16.mxu0 0
    %142 = vmatpush1.bf16.msra.mxu0 %v133
    %143 = vmatprep.subr.bf16.mxu0 0
    %144 = vmatpush1.bf16.msra.mxu0 0
    %145 = vmatprep.subr.bf16.mxu0 0
    %146 = vmatpush1.bf16.msra.mxu0 0
    %147 = vmatprep.subr.bf16.mxu0 0
    %148 = vmatpush1.bf16.msra.mxu0 0
    %149 = vmatprep.subr.bf16.mxu0 0
    %150 = vmatpush1.bf16.msra.mxu0 0
    %151 = vmatprep.subr.bf16.mxu0 0
    %152 = vmatpush1.bf16.msra.mxu0 0
    %153 = vmatprep.subr.bf16.mxu0 0
    %154 = vmatpush1.bf16.msra.mxu0 0
    %155 = vmatprep.subr.bf16.mxu0 0
    %156 = vmatpush1.bf16.msra.mxu0 0
    %157 = vmatprep.subr.bf16.mxu0 0
    %158 = vmatpush1.bf16.msra.mxu0 0
    %159 = vmatprep.subr.bf16.mxu0 0
    %160 = vmatpush1.bf16.msra.mxu0 0
    %161 = vmatprep.subr.bf16.mxu0 0
    %162 = vmatpush1.bf16.msra.mxu0 0
    %163 = vmatprep.subr.bf16.mxu0 0
    %164 = vmatpush1.bf16.msra.mxu0 0
    %165 = vmatprep.subr.bf16.mxu0 0
    %166 = vmatpush1.bf16.msra.mxu0 0
    %167 = vmatprep.subr.bf16.mxu0 0
    %168 = vmatpush1.bf16.msra.mxu0 0
    %169 = vmatprep.subr.bf16.mxu0 0
    %170 = vmatpush1.bf16.msra.mxu0 0
    %171 = vmatprep.mubr.bf16.mxu0 0
    %172 = vmatmul.mubr.bf16.gmra.mrb[0].mxu0 %v137
    %v173 = vpop.f32.mrb[0].mxu0
    %v174 = vadd.f32 %v122, %v173
    %v175 = vpop.f32.mrb[0].mxu0
    %v176 = vpop.f32.mrb[0].mxu0
    %v177 = vadd.f32 %v122, %v176
    %v178 = vpop.f32.mrb[0].mxu0
    %179 = vdwg.mxu0
    %v180 = vpack.c.bf16 %v177, %v174
    %182 = vrot.lane.b32.xlu0 %v180, 96
    %v183 = vpop.permute.xlu0 %182
    %vm184 = vcmask 64512
    %v186 = vsel %vm184, %v180, 0
    %v189 = vsel %vm184, %v183, 0
    %191 = vmatprep.subr.bf16.mxu0 0
    %192 = vmatpush1.bf16.xpose.msra.mxu0 %v189
    %193 = vmatprep.subr.bf16.mxu0 0
    %194 = vmatpush1.bf16.xpose.msra.mxu0 0
    %195 = vmatprep.subr.bf16.mxu0 0
    %196 = vmatpush1.bf16.xpose.msra.mxu0 0
    %197 = vmatprep.subr.bf16.mxu0 0
    %198 = vmatpush1.bf16.xpose.msra.mxu0 0
    %199 = vmatprep.subr.bf16.mxu0 0
    %200 = vmatpush1.bf16.xpose.msra.mxu0 0
    %201 = vmatprep.subr.bf16.mxu0 0
    %202 = vmatpush1.bf16.xpose.msra.mxu0 0
    %203 = vmatprep.subr.bf16.mxu0 0
    %204 = vmatpush1.bf16.xpose.msra.mxu0 0
    %205 = vmatprep.subr.bf16.mxu0 0
    %206 = vmatpush1.bf16.xpose.msra.mxu0 0
    %207 = vmatprep.subr.bf16.mxu0 0
    %208 = vmatpush1.bf16.xpose.msra.mxu0 0
    %209 = vmatprep.subr.bf16.mxu0 0
    %210 = vmatpush1.bf16.xpose.msra.mxu0 0
    %211 = vmatprep.subr.bf16.mxu0 0
    %212 = vmatpush1.bf16.xpose.msra.mxu0 0
    %213 = vmatprep.subr.bf16.mxu0 0
    %214 = vmatpush1.bf16.xpose.msra.mxu0 0
    %215 = vmatprep.subr.bf16.mxu0 0
    %216 = vmatpush1.bf16.xpose.msra.mxu0 0
    %217 = vmatprep.subr.bf16.mxu0 0
    %218 = vmatpush1.bf16.xpose.msra.mxu0 0
    %219 = vmatprep.subr.bf16.mxu0 0
    %220 = vmatpush1.bf16.xpose.msra.mxu0 0
    %221 = vmatprep.subr.bf16.mxu0 0
    %222 = vmatpush1.bf16.xpose.msra.mxu0 0
    %223 = vmatprep.mubr.bf16.mxu0 0
    %224 = vmatmul.mubr.bf16.gmra.mrb[0].mxu0 %v186
    %v225 = vpop.f32.mrb[0].mxu0
    %v226 = vadd.f32 %v64, %v225
    %v227 = vpop.f32.mrb[0].mxu0
    %v228 = vpop.f32.mrb[0].mxu0
    %v229 = vadd.f32 %v65, %v228
    %v230 = vpop.f32.mrb[0].mxu0
    %231 = vdwg.mxu0
    %vm232 = vcmask 130048
    %v233 = vsel %vm232, %v226, -inf
    %234 = vmax.xlane.f32.xlu0 %v233
    %v235 = vpop.xlane.xlu0 %234
    %v236 = vsel %vm232, %v229, -inf
    %237 = vmax.xlane.f32.xlu0 %v236
    %v238 = vpop.xlane.xlu0 %237
    %v239 = vsub.f32 %v226, %v235
    %v240 = vsub.f32 %v229, %v238
    %v241 = vmul.f32 %v239, 1.442695
    %v242 = vpow.pop %v241
    %v243 = vmul.f32 %v240, 1.442695
    %v244 = vpow.pop %v243
    %v245 = vsel %vm232, %v242, 0.0
    %246 = vadd.xlane.f32.xlu0 %v245
    %v247 = vpop.xlane.xlu0 %246
    %v248 = vsel %vm232, %v244, 0.0
    %249 = vadd.xlane.f32.xlu0 %v248
    %v250 = vpop.xlane.xlu0 %249
    %v251 = vrcp.pop %v247
    %v252 = vmul.f32 %v242, %v251
    %v253 = vrcp.pop %v250
    %v254 = vmul.f32 %v244, %v253
    %v255 = vpack.c.bf16 %v254, %v252
    %256 = vrot.lane.b32.xlu0 %v180, 64
    %v257 = vpop.permute.xlu0 %256
    %v260 = vsel %vm232, %v255, 0
    %262 = vmatprep.subr.bf16.mxu0 0
    %263 = vmatpush1.bf16.msra.mxu0 %v257
    %264 = vmatprep.subr.bf16.mxu0 0
    %265 = vmatpush1.bf16.msra.mxu0 0
    %266 = vmatprep.subr.bf16.mxu0 0
    %267 = vmatpush1.bf16.msra.mxu0 0
    %268 = vmatprep.subr.bf16.mxu0 0
    %269 = vmatpush1.bf16.msra.mxu0 0
    %270 = vmatprep.subr.bf16.mxu0 0
    %271 = vmatpush1.bf16.msra.mxu0 0
    %272 = vmatprep.subr.bf16.mxu0 0
    %273 = vmatpush1.bf16.msra.mxu0 0
    %274 = vmatprep.subr.bf16.mxu0 0
    %275 = vmatpush1.bf16.msra.mxu0 0
    %276 = vmatprep.subr.bf16.mxu0 0
    %277 = vmatpush1.bf16.msra.mxu0 0
    %278 = vmatprep.subr.bf16.mxu0 0
    %279 = vmatpush1.bf16.msra.mxu0 0
    %280 = vmatprep.subr.bf16.mxu0 0
    %281 = vmatpush1.bf16.msra.mxu0 0
    %282 = vmatprep.subr.bf16.mxu0 0
    %283 = vmatpush1.bf16.msra.mxu0 0
    %284 = vmatprep.subr.bf16.mxu0 0
    %285 = vmatpush1.bf16.msra.mxu0 0
    %286 = vmatprep.subr.bf16.mxu0 0
    %287 = vmatpush1.bf16.msra.mxu0 0
    %288 = vmatprep.subr.bf16.mxu0 0
    %289 = vmatpush1.bf16.msra.mxu0 0
    %290 = vmatprep.subr.bf16.mxu0 0
    %291 = vmatpush1.bf16.msra.mxu0 0
    %292 = vmatprep.subr.bf16.mxu0 0
    %293 = vmatpush1.bf16.msra.mxu0 0
    %294 = vmatprep.mubr.bf16.mxu0 0
    %295 = vmatmul.mubr.bf16.gmra.mrb[0].mxu0 %v260
    %v296 = vpop.f32.mrb[0].mxu0
    %v297 = vadd.f32 0.0, %v296
    %v298 = vpop.f32.mrb[0].mxu0
    %v299 = vpop.f32.mrb[0].mxu0
    %v300 = vadd.f32 0.0, %v299
    %v301 = vpop.f32.mrb[0].mxu0
    %302 = vdwg.mxu0
    %303 = vrot.lane.b32.xlu0 %v180, 120
    %v304 = vpop.permute.xlu0 %303
    %305 = vrot.lane.b32.xlu0 %v180, 88
    %v306 = vpop.permute.xlu0 %305
    %v308 = vsel %vm184, %v304, 0
    %v311 = vsel %vm184, %v306, 0
    %313 = vmatprep.subr.bf16.mxu0 0
    %314 = vmatpush1.bf16.xpose.msra.mxu0 %v311
    %315 = vmatprep.subr.bf16.mxu0 0
    %316 = vmatpush1.bf16.xpose.msra.mxu0 0
    %317 = vmatprep.subr.bf16.mxu0 0
    %318 = vmatpush1.bf16.xpose.msra.mxu0 0
    %319 = vmatprep.subr.bf16.mxu0 0
    %320 = vmatpush1.bf16.xpose.msra.mxu0 0
    %321 = vmatprep.subr.bf16.mxu0 0
    %322 = vmatpush1.bf16.xpose.msra.mxu0 0
    %323 = vmatprep.subr.bf16.mxu0 0
    %324 = vmatpush1.bf16.xpose.msra.mxu0 0
    %325 = vmatprep.subr.bf16.mxu0 0
    %326 = vmatpush1.bf16.xpose.msra.mxu0 0
    %327 = vmatprep.subr.bf16.mxu0 0
    %328 = vmatpush1.bf16.xpose.msra.mxu0 0
    %329 = vmatprep.subr.bf16.mxu0 0
    %330 = vmatpush1.bf16.xpose.msra.mxu0 0
    %331 = vmatprep.subr.bf16.mxu0 0
    %332 = vmatpush1.bf16.xpose.msra.mxu0 0
    %333 = vmatprep.subr.bf16.mxu0 0
    %334 = vmatpush1.bf16.xpose.msra.mxu0 0
    %335 = vmatprep.subr.bf16.mxu0 0
    %336 = vmatpush1.bf16.xpose.msra.mxu0 0
    %337 = vmatprep.subr.bf16.mxu0 0
    %338 = vmatpush1.bf16.xpose.msra.mxu0 0
    %339 = vmatprep.subr.bf16.mxu0 0
    %340 = vmatpush1.bf16.xpose.msra.mxu0 0
    %341 = vmatprep.subr.bf16.mxu0 0
    %342 = vmatpush1.bf16.xpose.msra.mxu0 0
    %343 = vmatprep.subr.bf16.mxu0 0
    %344 = vmatpush1.bf16.xpose.msra.mxu0 0
    %345 = vmatprep.mubr.bf16.mxu0 0
    %346 = vmatmul.mubr.bf16.gmra.mrb[0].mxu0 %v308
    %v347 = vpop.f32.mrb[0].mxu0
    %v348 = vadd.f32 %v64, %v347
    %v349 = vpop.f32.mrb[0].mxu0
    %v350 = vpop.f32.mrb[0].mxu0
    %v351 = vadd.f32 %v65, %v350
    %v352 = vpop.f32.mrb[0].mxu0
    %353 = vdwg.mxu0
    %v354 = vsel %vm232, %v348, -inf
    %355 = vmax.xlane.f32.xlu0 %v354
    %v356 = vpop.xlane.xlu0 %355
    %v357 = vsel %vm232, %v351, -inf
    %358 = vmax.xlane.f32.xlu0 %v357
    %v359 = vpop.xlane.xlu0 %358
    %v360 = vsub.f32 %v348, %v356
    %v361 = vsub.f32 %v351, %v359
    %v362 = vmul.f32 %v360, 1.442695
    %v363 = vpow.pop %v362
    %v364 = vmul.f32 %v361, 1.442695
    %v365 = vpow.pop %v364
    %v366 = vsel %vm232, %v363, 0.0
    %367 = vadd.xlane.f32.xlu0 %v366
    %v368 = vpop.xlane.xlu0 %367
    %v369 = vsel %vm232, %v365, 0.0
    %370 = vadd.xlane.f32.xlu0 %v369
    %v371 = vpop.xlane.xlu0 %370
    %v372 = vrcp.pop %v368
    %v373 = vmul.f32 %v363, %v372
    %v374 = vrcp.pop %v371
    %v375 = vmul.f32 %v365, %v374
    %v376 = vpack.c.bf16 %v375, %v373
    %377 = vrot.lane.b32.xlu0 %v180, 56
    %v378 = vpop.permute.xlu0 %377
    %v381 = vsel %vm232, %v376, 0
    %383 = vmatprep.subr.bf16.mxu0 0
    %384 = vmatpush1.bf16.msra.mxu0 %v378
    %385 = vmatprep.subr.bf16.mxu0 0
    %386 = vmatpush1.bf16.msra.mxu0 0
    %387 = vmatprep.subr.bf16.mxu0 0
    %388 = vmatpush1.bf16.msra.mxu0 0
    %389 = vmatprep.subr.bf16.mxu0 0
    %390 = vmatpush1.bf16.msra.mxu0 0
    %391 = vmatprep.subr.bf16.mxu0 0
    %392 = vmatpush1.bf16.msra.mxu0 0
    %393 = vmatprep.subr.bf16.mxu0 0
    %394 = vmatpush1.bf16.msra.mxu0 0
    %395 = vmatprep.subr.bf16.mxu0 0
    %396 = vmatpush1.bf16.msra.mxu0 0
    %397 = vmatprep.subr.bf16.mxu0 0
    %398 = vmatpush1.bf16.msra.mxu0 0
    %399 = vmatprep.subr.bf16.mxu0 0
    %400 = vmatpush1.bf16.msra.mxu0 0
    %401 = vmatprep.subr.bf16.mxu0 0
    %402 = vmatpush1.bf16.msra.mxu0 0
    %403 = vmatprep.subr.bf16.mxu0 0
    %404 = vmatpush1.bf16.msra.mxu0 0
    %405 = vmatprep.subr.bf16.mxu0 0
    %406 = vmatpush1.bf16.msra.mxu0 0
    %407 = vmatprep.subr.bf16.mxu0 0
    %408 = vmatpush1.bf16.msra.mxu0 0
    %409 = vmatprep.subr.bf16.mxu0 0
    %410 = vmatpush1.bf16.msra.mxu0 0
    %411 = vmatprep.subr.bf16.mxu0 0
    %412 = vmatpush1.bf16.msra.mxu0 0
    %413 = vmatprep.subr.bf16.mxu0 0
    %414 = vmatpush1.bf16.msra.mxu0 0
    %415 = vmatprep.mubr.bf16.mxu0 0
    %416 = vmatmul.mubr.bf16.gmra.mrb[0].mxu0 %v381
    %v417 = vpop.f32.mrb[0].mxu0
    %v418 = vadd.f32 0.0, %v417
    %v419 = vpop.f32.mrb[0].mxu0
    %v420 = vpop.f32.mrb[0].mxu0
    %v421 = vadd.f32 0.0, %v420
    %v422 = vpop.f32.mrb[0].mxu0
    %423 = vdwg.mxu0
    %424 = vrot.lane.b32.xlu0 %v180, 112
    %v425 = vpop.permute.xlu0 %424
    %426 = vrot.lane.b32.xlu0 %v180, 80
    %v427 = vpop.permute.xlu0 %426
    %v429 = vsel %vm184, %v425, 0
    %v432 = vsel %vm184, %v427, 0
    %434 = vmatprep.subr.bf16.mxu0 0
    %435 = vmatpush1.bf16.xpose.msra.mxu0 %v432
    %436 = vmatprep.subr.bf16.mxu0 0
    %437 = vmatpush1.bf16.xpose.msra.mxu0 0
    %438 = vmatprep.subr.bf16.mxu0 0
    %439 = vmatpush1.bf16.xpose.msra.mxu0 0
    %440 = vmatprep.subr.bf16.mxu0 0
    %441 = vmatpush1.bf16.xpose.msra.mxu0 0
    %442 = vmatprep.subr.bf16.mxu0 0
    %443 = vmatpush1.bf16.xpose.msra.mxu0 0
    %444 = vmatprep.subr.bf16.mxu0 0
    %445 = vmatpush1.bf16.xpose.msra.mxu0 0
    %446 = vmatprep.subr.bf16.mxu0 0
    %447 = vmatpush1.bf16.xpose.msra.mxu0 0
    %448 = vmatprep.subr.bf16.mxu0 0
    %449 = vmatpush1.bf16.xpose.msra.mxu0 0
    %450 = vmatprep.subr.bf16.mxu0 0
    %451 = vmatpush1.bf16.xpose.msra.mxu0 0
    %452 = vmatprep.subr.bf16.mxu0 0
    %453 = vmatpush1.bf16.xpose.msra.mxu0 0
    %454 = vmatprep.subr.bf16.mxu0 0
    %455 = vmatpush1.bf16.xpose.msra.mxu0 0
    %456 = vmatprep.subr.bf16.mxu0 0
    %457 = vmatpush1.bf16.xpose.msra.mxu0 0
    %458 = vmatprep.subr.bf16.mxu0 0
    %459 = vmatpush1.bf16.xpose.msra.mxu0 0
    %460 = vmatprep.subr.bf16.mxu0 0
    %461 = vmatpush1.bf16.xpose.msra.mxu0 0
    %462 = vmatprep.subr.bf16.mxu0 0
    %463 = vmatpush1.bf16.xpose.msra.mxu0 0
    %464 = vmatprep.subr.bf16.mxu0 0
    %465 = vmatpush1.bf16.xpose.msra.mxu0 0
    %466 = vmatprep.mubr.bf16.mxu0 0
    %467 = vmatmul.mubr.bf16.gmra.mrb[0].mxu0 %v429
    %v468 = vpop.f32.mrb[0].mxu0
    %v469 = vadd.f32 %v64, %v468
    %v470 = vpop.f32.mrb[0].mxu0
    %v471 = vpop.f32.mrb[0].mxu0
    %v472 = vadd.f32 %v65, %v471
    %v473 = vpop.f32.mrb[0].mxu0
    %474 = vdwg.mxu0
    %v475 = vsel %vm232, %v469, -inf
    %476 = vmax.xlane.f32.xlu0 %v475
    %v477 = vpop.xlane.xlu0 %476
    %v478 = vsel %vm232, %v472, -inf
    %479 = vmax.xlane.f32.xlu0 %v478
    %v480 = vpop.xlane.xlu0 %479
    %v481 = vsub.f32 %v469, %v477
    %v482 = vsub.f32 %v472, %v480
    %v483 = vmul.f32 %v481, 1.442695
    %v484 = vpow.pop %v483
    %v485 = vmul.f32 %v482, 1.442695
    %v486 = vpow.pop %v485
    %v487 = vsel %vm232, %v484, 0.0
    %488 = vadd.xlane.f32.xlu0 %v487
    %v489 = vpop.xlane.xlu0 %488
    %v490 = vsel %vm232, %v486, 0.0
    %491 = vadd.xlane.f32.xlu0 %v490
    %v492 = vpop.xlane.xlu0 %491
    %v493 = vrcp.pop %v489
    %v494 = vmul.f32 %v484, %v493
    %v495 = vrcp.pop %v492
    %v496 = vmul.f32 %v486, %v495
    %v497 = vpack.c.bf16 %v496, %v494
    %498 = vrot.lane.b32.xlu0 %v180, 48
    %v499 = vpop.permute.xlu0 %498
    %v502 = vsel %vm232, %v497, 0
    %504 = vmatprep.subr.bf16.mxu0 0
    %505 = vmatpush1.bf16.msra.mxu0 %v499
    %506 = vmatprep.subr.bf16.mxu0 0
    %507 = vmatpush1.bf16.msra.mxu0 0
    %508 = vmatprep.subr.bf16.mxu0 0
    %509 = vmatpush1.bf16.msra.mxu0 0
    %510 = vmatprep.subr.bf16.mxu0 0
    %511 = vmatpush1.bf16.msra.mxu0 0
    %512 = vmatprep.subr.bf16.mxu0 0
    %513 = vmatpush1.bf16.msra.mxu0 0
    %514 = vmatprep.subr.bf16.mxu0 0
    %515 = vmatpush1.bf16.msra.mxu0 0
    %516 = vmatprep.subr.bf16.mxu0 0
    %517 = vmatpush1.bf16.msra.mxu0 0
    %518 = vmatprep.subr.bf16.mxu0 0
    %519 = vmatpush1.bf16.msra.mxu0 0
    %520 = vmatprep.subr.bf16.mxu0 0
    %521 = vmatpush1.bf16.msra.mxu0 0
    %522 = vmatprep.subr.bf16.mxu0 0
    %523 = vmatpush1.bf16.msra.mxu0 0
    %524 = vmatprep.subr.bf16.mxu0 0
    %525 = vmatpush1.bf16.msra.mxu0 0
    %526 = vmatprep.subr.bf16.mxu0 0
    %527 = vmatpush1.bf16.msra.mxu0 0
    %528 = vmatprep.subr.bf16.mxu0 0
    %529 = vmatpush1.bf16.msra.mxu0 0
    %530 = vmatprep.subr.bf16.mxu0 0
    %531 = vmatpush1.bf16.msra.mxu0 0
    %532 = vmatprep.subr.bf16.mxu0 0
    %533 = vmatpush1.bf16.msra.mxu0 0
    %534 = vmatprep.subr.bf16.mxu0 0
    %535 = vmatpush1.bf16.msra.mxu0 0
    %536 = vmatprep.mubr.bf16.mxu0 0
    %537 = vmatmul.mubr.bf16.gmra.mrb[0].mxu0 %v502
    %v538 = vpop.f32.mrb[0].mxu0
    %v539 = vadd.f32 0.0, %v538
    %v540 = vpop.f32.mrb[0].mxu0
    %v541 = vpop.f32.mrb[0].mxu0
    %v542 = vadd.f32 0.0, %v541
    %v543 = vpop.f32.mrb[0].mxu0
    %544 = vdwg.mxu0
    %545 = vrot.lane.b32.xlu0 %v180, 104
    %v546 = vpop.permute.xlu0 %545
    %547 = vrot.lane.b32.xlu0 %v180, 72
    %v548 = vpop.permute.xlu0 %547
    %v550 = vsel %vm184, %v546, 0
    %v553 = vsel %vm184, %v548, 0
    %555 = vmatprep.subr.bf16.mxu0 0
    %556 = vmatpush1.bf16.xpose.msra.mxu0 %v553
    %557 = vmatprep.subr.bf16.mxu0 0
    %558 = vmatpush1.bf16.xpose.msra.mxu0 0
    %559 = vmatprep.subr.bf16.mxu0 0
    %560 = vmatpush1.bf16.xpose.msra.mxu0 0
    %561 = vmatprep.subr.bf16.mxu0 0
    %562 = vmatpush1.bf16.xpose.msra.mxu0 0
    %563 = vmatprep.subr.bf16.mxu0 0
    %564 = vmatpush1.bf16.xpose.msra.mxu0 0
    %565 = vmatprep.subr.bf16.mxu0 0
    %566 = vmatpush1.bf16.xpose.msra.mxu0 0
    %567 = vmatprep.subr.bf16.mxu0 0
    %568 = vmatpush1.bf16.xpose.msra.mxu0 0
    %569 = vmatprep.subr.bf16.mxu0 0
    %570 = vmatpush1.bf16.xpose.msra.mxu0 0
    %571 = vmatprep.subr.bf16.mxu0 0
    %572 = vmatpush1.bf16.xpose.msra.mxu0 0
    %573 = vmatprep.subr.bf16.mxu0 0
    %574 = vmatpush1.bf16.xpose.msra.mxu0 0
    %575 = vmatprep.subr.bf16.mxu0 0
    %576 = vmatpush1.bf16.xpose.msra.mxu0 0
    %577 = vmatprep.subr.bf16.mxu0 0
    %578 = vmatpush1.bf16.xpose.msra.mxu0 0
    %579 = vmatprep.subr.bf16.mxu0 0
    %580 = vmatpush1.bf16.xpose.msra.mxu0 0
    %581 = vmatprep.subr.bf16.mxu0 0
    %582 = vmatpush1.bf16.xpose.msra.mxu0 0
    %583 = vmatprep.subr.bf16.mxu0 0
    %584 = vmatpush1.bf16.xpose.msra.mxu0 0
    %585 = vmatprep.subr.bf16.mxu0 0
    %586 = vmatpush1.bf16.xpose.msra.mxu0 0
    %587 = vmatprep.mubr.bf16.mxu0 0
    %588 = vmatmul.mubr.bf16.gmra.mrb[0].mxu0 %v550
    %v589 = vpop.f32.mrb[0].mxu0
    %v590 = vadd.f32 %v64, %v589
    %v591 = vpop.f32.mrb[0].mxu0
    %v592 = vpop.f32.mrb[0].mxu0
    %v593 = vadd.f32 %v65, %v592
    %v594 = vpop.f32.mrb[0].mxu0
    %595 = vdwg.mxu0
    %v596 = vsel %vm232, %v590, -inf
    %597 = vmax.xlane.f32.xlu0 %v596
    %v598 = vpop.xlane.xlu0 %597
    %v599 = vsel %vm232, %v593, -inf
    %600 = vmax.xlane.f32.xlu0 %v599
    %v601 = vpop.xlane.xlu0 %600
    %v602 = vsub.f32 %v590, %v598
    %v603 = vsub.f32 %v593, %v601
    %v604 = vmul.f32 %v602, 1.442695
    %v605 = vpow.pop %v604
    %v606 = vmul.f32 %v603, 1.442695
    %v607 = vpow.pop %v606
    %v608 = vsel %vm232, %v605, 0.0
    %609 = vadd.xlane.f32.xlu0 %v608
    %v610 = vpop.xlane.xlu0 %609
    %v611 = vsel %vm232, %v607, 0.0
    %612 = vadd.xlane.f32.xlu0 %v611
    %v613 = vpop.xlane.xlu0 %612
    %v614 = vrcp.pop %v610
    %v615 = vmul.f32 %v605, %v614
    %v616 = vrcp.pop %v613
    %v617 = vmul.f32 %v607, %v616
    %v618 = vpack.c.bf16 %v617, %v615
    %619 = vrot.lane.b32.xlu0 %v180, 40
    %v620 = vpop.permute.xlu0 %619
    %v623 = vsel %vm232, %v618, 0
    %625 = vmatprep.subr.bf16.mxu0 0
    %626 = vmatpush1.bf16.msra.mxu0 %v620
    %627 = vmatprep.subr.bf16.mxu0 0
    %628 = vmatpush1.bf16.msra.mxu0 0
    %629 = vmatprep.subr.bf16.mxu0 0
    %630 = vmatpush1.bf16.msra.mxu0 0
    %631 = vmatprep.subr.bf16.mxu0 0
    %632 = vmatpush1.bf16.msra.mxu0 0
    %633 = vmatprep.subr.bf16.mxu0 0
    %634 = vmatpush1.bf16.msra.mxu0 0
    %635 = vmatprep.subr.bf16.mxu0 0
    %636 = vmatpush1.bf16.msra.mxu0 0
    %637 = vmatprep.subr.bf16.mxu0 0
    %638 = vmatpush1.bf16.msra.mxu0 0
    %639 = vmatprep.subr.bf16.mxu0 0
    %640 = vmatpush1.bf16.msra.mxu0 0
    %641 = vmatprep.subr.bf16.mxu0 0
    %642 = vmatpush1.bf16.msra.mxu0 0
    %643 = vmatprep.subr.bf16.mxu0 0
    %644 = vmatpush1.bf16.msra.mxu0 0
    %645 = vmatprep.subr.bf16.mxu0 0
    %646 = vmatpush1.bf16.msra.mxu0 0
    %647 = vmatprep.subr.bf16.mxu0 0
    %648 = vmatpush1.bf16.msra.mxu0 0
    %649 = vmatprep.subr.bf16.mxu0 0
    %650 = vmatpush1.bf16.msra.mxu0 0
    %651 = vmatprep.subr.bf16.mxu0 0
    %652 = vmatpush1.bf16.msra.mxu0 0
    %653 = vmatprep.subr.bf16.mxu0 0
    %654 = vmatpush1.bf16.msra.mxu0 0
    %655 = vmatprep.subr.bf16.mxu0 0
    %656 = vmatpush1.bf16.msra.mxu0 0
    %657 = vmatprep.mubr.bf16.mxu0 0
    %658 = vmatmul.mubr.bf16.gmra.mrb[0].mxu0 %v623
    %v659 = vpop.f32.mrb[0].mxu0
    %v660 = vadd.f32 0.0, %v659
    %v661 = vpop.f32.mrb[0].mxu0
    %v662 = vpop.f32.mrb[0].mxu0
    %v663 = vadd.f32 0.0, %v662
    %v664 = vpop.f32.mrb[0].mxu0
    %665 = vdwg.mxu0
    %668 = vrot.lane.b32.xlu0 %v418, 8
    %v669 = vpop.permute.xlu0 %668
    %670 = vrot.lane.b32.xlu0 %v421, 8
    %v671 = vpop.permute.xlu0 %670
    %676 = vrot.lane.b32.xlu0 %v539, 16
    %v677 = vpop.permute.xlu0 %676
    %678 = vrot.lane.b32.xlu0 %v542, 16
    %v679 = vpop.permute.xlu0 %678
    %684 = vrot.lane.b32.xlu0 %v660, 24
    %v685 = vpop.permute.xlu0 %684
    %686 = vrot.lane.b32.xlu0 %v663, 24
    %v687 = vpop.permute.xlu0 %686
    %v690 = vsel %vm184, %v297, %v669
    %v691 = vsel %vm184, %v300, %v671
    %v692 = vsel %vm232, %v690, %v677
    %v693 = vsel %vm232, %v691, %v679
    %vm694 = vcmask 195584
    %v695 = vsel %vm694, %v692, %v685
    %v696 = vsel %vm694, %v693, %v687
    %v697 = vpack.c.bf16 %v696, %v695
    %v698 = vld [vmem:[%s7] sm:$0xf]
    %v699 = vld [vmem:[%s7 + $0x4] sm:$0xf]
    %v700 = vld [vmem:[%s7 + $0x8] sm:$0xf]
    %v701 = vld [vmem:[%s7 + $0xc] sm:$0xf]
    %v702 = vld [vmem:[%s8] sm:$0x1]
    %v704 = vlaneseq
    %v705 = vshrl.u32 %v704, 7
    %v706 = vsub.s32 0, %v705
    %v707 = vrot.slane %v702, %v706
    %v713 = vunpack.c.l.b16 %v698
    %v714 = vunpack.c.l.b16 %v699
    %v715 = vunpack.c.l.b16 %v700
    %v716 = vunpack.c.l.b16 %v701
    %v717 = vpack.c.b16 %v714, %v713
    %v718 = vpack.c.b16 %v716, %v715
    %v722 = vsel %vm68, %v697, 0
    %724 = vmatprep.subr.bf16.mxu0 0
    %725 = vmatpush1.bf16.msra.mxu0 %v717
    %726 = vmatprep.subr.bf16.mxu0 0
    %727 = vmatpush1.bf16.msra.mxu0 %v718
    %728 = vmatprep.subr.bf16.mxu0 0
    %729 = vmatpush1.bf16.msra.mxu0 0
    %730 = vmatprep.subr.bf16.mxu0 0
    %731 = vmatpush1.bf16.msra.mxu0 0
    %732 = vmatprep.subr.bf16.mxu0 0
    %733 = vmatpush1.bf16.msra.mxu0 0
    %734 = vmatprep.subr.bf16.mxu0 0
    %735 = vmatpush1.bf16.msra.mxu0 0
    %736 = vmatprep.subr.bf16.mxu0 0
    %737 = vmatpush1.bf16.msra.mxu0 0
    %738 = vmatprep.subr.bf16.mxu0 0
    %739 = vmatpush1.bf16.msra.mxu0 0
    %740 = vmatprep.subr.bf16.mxu0 0
    %741 = vmatpush1.bf16.msra.mxu0 0
    %742 = vmatprep.subr.bf16.mxu0 0
    %743 = vmatpush1.bf16.msra.mxu0 0
    %744 = vmatprep.subr.bf16.mxu0 0
    %745 = vmatpush1.bf16.msra.mxu0 0
    %746 = vmatprep.subr.bf16.mxu0 0
    %747 = vmatpush1.bf16.msra.mxu0 0
    %748 = vmatprep.subr.bf16.mxu0 0
    %749 = vmatpush1.bf16.msra.mxu0 0
    %750 = vmatprep.subr.bf16.mxu0 0
    %751 = vmatpush1.bf16.msra.mxu0 0
    %752 = vmatprep.subr.bf16.mxu0 0
    %753 = vmatpush1.bf16.msra.mxu0 0
    %754 = vmatprep.subr.bf16.mxu0 0
    %755 = vmatpush1.bf16.msra.mxu0 0
    %756 = vmatprep.mubr.bf16.mxu0 0
    %757 = vmatmul.mubr.bf16.gmra.mrb[0].mxu0 %v722
    %v758 = vpop.f32.mrb[0].mxu0
    %v759 = vadd.f32 %v707, %v758
    %v760 = vpop.f32.mrb[0].mxu0
    %v761 = vpop.f32.mrb[0].mxu0
    %v762 = vadd.f32 %v707, %v761
    %v763 = vpop.f32.mrb[0].mxu0
    %764 = vdwg.mxu0
    %v765 = vadd.f32 %v62, %v759
    %v766 = vadd.f32 %v63, %v762
    %v767 = vld [vmem:[%s9] sm:$0x1]
    %v768 = vld [vmem:[%s10] sm:$0x1]
    %v769 = vsel %vm68, %v765, 0.0
    %770 = vadd.xlane.f32.xlu0 %v769
    %v771 = vpop.xlane.xlu0 %770
    %v772 = vsel %vm68, %v766, 0.0
    %773 = vadd.xlane.f32.xlu0 %v772
    %v774 = vpop.xlane.xlu0 %773
    %v775 = vmul.f32 %v771, %v75
    %v776 = vmul.f32 %v774, %v75
    %v777 = vsub.f32 %v765, %v775
    %v778 = vsub.f32 %v766, %v776
    %v779 = vmul.f32 %v777, %v777
    %v780 = vmul.f32 %v778, %v778
    %v781 = vsel %vm68, %v779, 0.0
    %782 = vadd.xlane.f32.xlu0 %v781
    %v783 = vpop.xlane.xlu0 %782
    %v784 = vsel %vm68, %v780, 0.0
    %785 = vadd.xlane.f32.xlu0 %v784
    %v786 = vpop.xlane.xlu0 %785
    %v787 = vmul.f32 %v783, %v75
    %v788 = vmul.f32 %v786, %v75
    %v789 = vadd.f32 %v787, 1e-06
    %v790 = vadd.f32 %v788, 1e-06
    %v791 = vrsqrt.pop %v789
    %v792 = vrsqrt.pop %v790
    %v793 = vmul.f32 %v777, %v791
    %v794 = vmul.f32 %v778, %v792
    %v796 = vlaneseq
    %v797 = vshrl.u32 %v796, 7
    %v798 = vsub.s32 0, %v797
    %v799 = vrot.slane %v767, %v798
    %v801 = vmul.f32 %v793, %v799
    %v802 = vmul.f32 %v794, %v799
    %v804 = vlaneseq
    %v805 = vshrl.u32 %v804, 7
    %v806 = vsub.s32 0, %v805
    %v807 = vrot.slane %v768, %v806
    %v809 = vadd.f32 %v801, %v807
    %v810 = vadd.f32 %v802, %v807
    %v811 = vpack.c.bf16 %v810, %v809
    %v812 = vld [vmem:[%s11] sm:$0xf]
    %v813 = vld [vmem:[%s11 + $0x4] sm:$0xf]
    %v814 = vld [vmem:[%s11 + $0x8] sm:$0xf]
    %v815 = vld [vmem:[%s11 + $0xc] sm:$0xf]
    %v816 = vld [vmem:[%s12] sm:$0x1]
    %v818 = vlaneseq
    %v819 = vshrl.u32 %v818, 7
    %v820 = vsub.s32 0, %v819
    %v821 = vrot.slane %v816, %v820
    %v827 = vunpack.c.l.b16 %v812
    %v828 = vunpack.c.l.b16 %v813
    %v829 = vunpack.c.l.b16 %v814
    %v830 = vunpack.c.l.b16 %v815
    %v831 = vpack.c.b16 %v828, %v827
    %v832 = vpack.c.b16 %v830, %v829
    %v836 = vsel %vm68, %v811, 0
    %838 = vmatprep.subr.bf16.mxu0 0
    %839 = vmatpush1.bf16.msra.mxu0 %v831
    %840 = vmatprep.subr.bf16.mxu0 0
    %841 = vmatpush1.bf16.msra.mxu0 %v832
    %842 = vmatprep.subr.bf16.mxu0 0
    %843 = vmatpush1.bf16.msra.mxu0 0
    %844 = vmatprep.subr.bf16.mxu0 0
    %845 = vmatpush1.bf16.msra.mxu0 0
    %846 = vmatprep.subr.bf16.mxu0 0
    %847 = vmatpush1.bf16.msra.mxu0 0
    %848 = vmatprep.subr.bf16.mxu0 0
    %849 = vmatpush1.bf16.msra.mxu0 0
    %850 = vmatprep.subr.bf16.mxu0 0
    %851 = vmatpush1.bf16.msra.mxu0 0
    %852 = vmatprep.subr.bf16.mxu0 0
    %853 = vmatpush1.bf16.msra.mxu0 0
    %854 = vmatprep.subr.bf16.mxu0 0
    %855 = vmatpush1.bf16.msra.mxu0 0
    %856 = vmatprep.subr.bf16.mxu0 0
    %857 = vmatpush1.bf16.msra.mxu0 0
    %858 = vmatprep.subr.bf16.mxu0 0
    %859 = vmatpush1.bf16.msra.mxu0 0
    %860 = vmatprep.subr.bf16.mxu0 0
    %861 = vmatpush1.bf16.msra.mxu0 0
    %862 = vmatprep.subr.bf16.mxu0 0
    %863 = vmatpush1.bf16.msra.mxu0 0
    %864 = vmatprep.subr.bf16.mxu0 0
    %865 = vmatpush1.bf16.msra.mxu0 0
    %866 = vmatprep.subr.bf16.mxu0 0
    %867 = vmatpush1.bf16.msra.mxu0 0
    %868 = vmatprep.subr.bf16.mxu0 0
    %869 = vmatpush1.bf16.msra.mxu0 0
    %870 = vmatprep.mubr.bf16.mxu0 0
    %871 = vmatmul.mubr.bf16.gmra.mrb[0].mxu0 %v836
    %v872 = vpop.f32.mrb[0].mxu0
    %v873 = vadd.f32 %v821, %v872
    %v874 = vpop.f32.mrb[0].mxu0
    %v875 = vpop.f32.mrb[0].mxu0
    %v876 = vadd.f32 %v821, %v875
    %v877 = vpop.f32.mrb[0].mxu0
    %878 = vdwg.mxu0
    %v879 = vmul.f32 %v873, 0.5
    %v880 = vmul.f32 %v876, 0.5
    %v881 = vmul.f32 %v873, 0.70710677
    %v882 = vmul.f32 %v876, 0.70710677
    %v883 = verf.f32.pop %v881
    %v884 = verf.f32.pop %v882
    %v885 = vadd.f32 %v883, 1.0
    %v886 = vadd.f32 %v884, 1.0
    %v887 = vmul.f32 %v879, %v885
    %v888 = vmul.f32 %v880, %v886
    %v889 = vpack.c.bf16 %v888, %v887
    %v890 = vld [vmem:[%s13] sm:$0xf]
    %v891 = vld [vmem:[%s13 + $0x4] sm:$0xf]
    %v892 = vld [vmem:[%s13 + $0x8] sm:$0xf]
    %v893 = vld [vmem:[%s13 + $0xc] sm:$0xf]
    %v894 = vld [vmem:[%s13 + $0x10] sm:$0xf]
    %v895 = vld [vmem:[%s13 + $0x14] sm:$0xf]
    %v896 = vld [vmem:[%s13 + $0x18] sm:$0xf]
    %v897 = vld [vmem:[%s13 + $0x1c] sm:$0xf]
    %v898 = vld [vmem:[%s14] sm:$0x1]
    %v900 = vlaneseq
    %v901 = vshrl.u32 %v900, 7
    %v902 = vsub.s32 0, %v901
    %v903 = vrot.slane %v898, %v902
    %v913 = vunpack.c.l.b16 %v890
    %v914 = vunpack.c.l.b16 %v891
    %v915 = vunpack.c.l.b16 %v892
    %v916 = vunpack.c.l.b16 %v893
    %v917 = vunpack.c.l.b16 %v894
    %v918 = vunpack.c.l.b16 %v895
    %v919 = vunpack.c.l.b16 %v896
    %v920 = vunpack.c.l.b16 %v897
    %v921 = vpack.c.b16 %v914, %v913
    %v922 = vpack.c.b16 %v916, %v915
    %v923 = vpack.c.b16 %v918, %v917
    %v924 = vpack.c.b16 %v920, %v919
    %vm929 = vcmask 523264
    %v931 = vsel %vm929, %v889, 0
    %933 = vmatprep.subr.bf16.mxu0 0
    %934 = vmatpush1.bf16.msra.mxu0 %v921
    %935 = vmatprep.subr.bf16.mxu0 0
    %936 = vmatpush1.bf16.msra.mxu0 %v922
    %937 = vmatprep.subr.bf16.mxu0 0
    %938 = vmatpush1.bf16.msra.mxu0 %v923
    %939 = vmatprep.subr.bf16.mxu0 0
    %940 = vmatpush1.bf16.msra.mxu0 %v924
    %941 = vmatprep.subr.bf16.mxu0 0
    %942 = vmatpush1.bf16.msra.mxu0 0
    %943 = vmatprep.subr.bf16.mxu0 0
    %944 = vmatpush1.bf16.msra.mxu0 0
    %945 = vmatprep.subr.bf16.mxu0 0
    %946 = vmatpush1.bf16.msra.mxu0 0
    %947 = vmatprep.subr.bf16.mxu0 0
    %948 = vmatpush1.bf16.msra.mxu0 0
    %949 = vmatprep.subr.bf16.mxu0 0
    %950 = vmatpush1.bf16.msra.mxu0 0
    %951 = vmatprep.subr.bf16.mxu0 0
    %952 = vmatpush1.bf16.msra.mxu0 0
    %953 = vmatprep.subr.bf16.mxu0 0
    %954 = vmatpush1.bf16.msra.mxu0 0
    %955 = vmatprep.subr.bf16.mxu0 0
    %956 = vmatpush1.bf16.msra.mxu0 0
    %957 = vmatprep.subr.bf16.mxu0 0
    %958 = vmatpush1.bf16.msra.mxu0 0
    %959 = vmatprep.subr.bf16.mxu0 0
    %960 = vmatpush1.bf16.msra.mxu0 0
    %961 = vmatprep.subr.bf16.mxu0 0
    %962 = vmatpush1.bf16.msra.mxu0 0
    %963 = vmatprep.subr.bf16.mxu0 0
    %964 = vmatpush1.bf16.msra.mxu0 0
    %965 = vmatprep.mubr.bf16.mxu0 0
    %966 = vmatmul.mubr.bf16.gmra.mrb[0].mxu0 %v931
    %v967 = vpop.f32.mrb[0].mxu0
    %v968 = vadd.f32 %v903, %v967
    %v969 = vpop.f32.mrb[0].mxu0
    %v970 = vpop.f32.mrb[0].mxu0
    %v971 = vadd.f32 %v903, %v970
    %v972 = vpop.f32.mrb[0].mxu0
    %973 = vdwg.mxu0
    %v974 = vadd.f32 %v765, %v968
    %v975 = vadd.f32 %v766, %v971
    %s976 = scalar_lea.vmem %s2, 16
    %v977 = vld [vmem:[%s976] sm:$0xff]
    %v978 = vld [vmem:[%s976 + $0x8] sm:$0xff]
    %s979 = scalar_lea.vmem %s3, 1
    %v980 = vld [vmem:[%s979] sm:$0x1]
    %s981 = scalar_lea.vmem %s4, 1
    %v982 = vld [vmem:[%s981] sm:$0x1]
    %v983 = vsel %vm68, %v974, 0.0
    %984 = vadd.xlane.f32.xlu0 %v983
    %v985 = vpop.xlane.xlu0 %984
    %v986 = vsel %vm68, %v975, 0.0
    %987 = vadd.xlane.f32.xlu0 %v986
    %v988 = vpop.xlane.xlu0 %987
    %v989 = vmul.f32 %v985, %v75
    %v990 = vmul.f32 %v988, %v75
    %v991 = vsub.f32 %v974, %v989
    %v992 = vsub.f32 %v975, %v990
    %v993 = vmul.f32 %v991, %v991
    %v994 = vmul.f32 %v992, %v992
    %v995 = vsel %vm68, %v993, 0.0
    %996 = vadd.xlane.f32.xlu0 %v995
    %v997 = vpop.xlane.xlu0 %996
    %v998 = vsel %vm68, %v994, 0.0
    %999 = vadd.xlane.f32.xlu0 %v998
    %v1000 = vpop.xlane.xlu0 %999
    %v1001 = vmul.f32 %v997, %v75
    %v1002 = vmul.f32 %v1000, %v75
    %v1003 = vadd.f32 %v1001, 1e-06
    %v1004 = vadd.f32 %v1002, 1e-06
    %v1005 = vrsqrt.pop %v1003
    %v1006 = vrsqrt.pop %v1004
    %v1007 = vmul.f32 %v991, %v1005
    %v1008 = vmul.f32 %v992, %v1006
    %v1010 = vlaneseq
    %v1011 = vshrl.u32 %v1010, 7
    %v1012 = vsub.s32 0, %v1011
    %v1013 = vrot.slane %v980, %v1012
    %v1015 = vmul.f32 %v1007, %v1013
    %v1016 = vmul.f32 %v1008, %v1013
    %v1018 = vlaneseq
    %v1019 = vshrl.u32 %v1018, 7
    %v1020 = vsub.s32 0, %v1019
    %v1021 = vrot.slane %v982, %v1020
    %v1023 = vadd.f32 %v1015, %v1021
    %v1024 = vadd.f32 %v1016, %v1021
    %v1025 = vpack.c.bf16 %v1024, %v1023
    %s1026 = scalar_lea.vmem %s5, 16
    %v1027 = vld [vmem:[%s1026] sm:$0xf]
    %v1028 = vld [vmem:[%s1026 + $0x4] sm:$0xf]
    %v1029 = vld [vmem:[%s1026 + $0x8] sm:$0xf]
    %v1030 = vld [vmem:[%s1026 + $0xc] sm:$0xf]
    %s1031 = scalar_lea.vmem %s6, 1
    %v1032 = vld [vmem:[%s1031] sm:$0x1]
    %v1034 = vlaneseq
    %v1035 = vshrl.u32 %v1034, 7
    %v1036 = vsub.s32 0, %v1035
    %v1037 = vrot.slane %v1032, %v1036
    %v1043 = vunpack.c.l.b16 %v1027
    %v1044 = vunpack.c.l.b16 %v1028
    %v1045 = vunpack.c.l.b16 %v1029
    %v1046 = vunpack.c.l.b16 %v1030
    %v1047 = vpack.c.b16 %v1044, %v1043
    %v1048 = vpack.c.b16 %v1046, %v1045
    %v1052 = vsel %vm68, %v1025, 0
    %1054 = vmatprep.subr.bf16.mxu0 0
    %1055 = vmatpush1.bf16.msra.mxu0 %v1047
    %1056 = vmatprep.subr.bf16.mxu0 0
    %1057 = vmatpush1.bf16.msra.mxu0 %v1048
    %1058 = vmatprep.subr.bf16.mxu0 0
    %1059 = vmatpush1.bf16.msra.mxu0 0
    %1060 = vmatprep.subr.bf16.mxu0 0
    %1061 = vmatpush1.bf16.msra.mxu0 0
    %1062 = vmatprep.subr.bf16.mxu0 0
    %1063 = vmatpush1.bf16.msra.mxu0 0
    %1064 = vmatprep.subr.bf16.mxu0 0
    %1065 = vmatpush1.bf16.msra.mxu0 0
    %1066 = vmatprep.subr.bf16.mxu0 0
    %1067 = vmatpush1.bf16.msra.mxu0 0
    %1068 = vmatprep.subr.bf16.mxu0 0
    %1069 = vmatpush1.bf16.msra.mxu0 0
    %1070 = vmatprep.subr.bf16.mxu0 0
    %1071 = vmatpush1.bf16.msra.mxu0 0
    %1072 = vmatprep.subr.bf16.mxu0 0
    %1073 = vmatpush1.bf16.msra.mxu0 0
    %1074 = vmatprep.subr.bf16.mxu0 0
    %1075 = vmatpush1.bf16.msra.mxu0 0
    %1076 = vmatprep.subr.bf16.mxu0 0
    %1077 = vmatpush1.bf16.msra.mxu0 0
    %1078 = vmatprep.subr.bf16.mxu0 0
    %1079 = vmatpush1.bf16.msra.mxu0 0
    %1080 = vmatprep.subr.bf16.mxu0 0
    %1081 = vmatpush1.bf16.msra.mxu0 0
    %1082 = vmatprep.subr.bf16.mxu0 0
    %1083 = vmatpush1.bf16.msra.mxu0 0
    %1084 = vmatprep.subr.bf16.mxu0 0
    %1085 = vmatpush1.bf16.msra.mxu0 0
    %1086 = vmatprep.mubr.bf16.mxu0 0
    %1087 = vmatmul.mubr.bf16.gmra.mrb[0].mxu0 %v1052
    %v1088 = vpop.f32.mrb[0].mxu0
    %v1089 = vadd.f32 %v1037, %v1088
    %v1090 = vpop.f32.mrb[0].mxu0
    %v1091 = vpop.f32.mrb[0].mxu0
    %v1092 = vadd.f32 %v1037, %v1091
    %v1093 = vpop.f32.mrb[0].mxu0
    %1094 = vdwg.mxu0
    %v1095 = vpack.c.bf16 %v1092, %v1089
    %1097 = vrot.lane.b32.xlu0 %v1095, 96
    %v1098 = vpop.permute.xlu0 %1097
    %v1100 = vsel %vm184, %v1095, 0
    %v1103 = vsel %vm184, %v1098, 0
    %1105 = vmatprep.subr.bf16.mxu0 0
    %1106 = vmatpush1.bf16.xpose.msra.mxu0 %v1103
    %1107 = vmatprep.subr.bf16.mxu0 0
    %1108 = vmatpush1.bf16.xpose.msra.mxu0 0
    %1109 = vmatprep.subr.bf16.mxu0 0
    %1110 = vmatpush1.bf16.xpose.msra.mxu0 0
    %1111 = vmatprep.subr.bf16.mxu0 0
    %1112 = vmatpush1.bf16.xpose.msra.mxu0 0
    %1113 = vmatprep.subr.bf16.mxu0 0
    %1114 = vmatpush1.bf16.xpose.msra.mxu0 0
    %1115 = vmatprep.subr.bf16.mxu0 0
    %1116 = vmatpush1.bf16.xpose.msra.mxu0 0
    %1117 = vmatprep.subr.bf16.mxu0 0
    %1118 = vmatpush1.bf16.xpose.msra.mxu0 0
    %1119 = vmatprep.subr.bf16.mxu0 0
    %1120 = vmatpush1.bf16.xpose.msra.mxu0 0
    %1121 = vmatprep.subr.bf16.mxu0 0
    %1122 = vmatpush1.bf16.xpose.msra.mxu0 0
    %1123 = vmatprep.subr.bf16.mxu0 0
    %1124 = vmatpush1.bf16.xpose.msra.mxu0 0
    %1125 = vmatprep.subr.bf16.mxu0 0
    %1126 = vmatpush1.bf16.xpose.msra.mxu0 0
    %1127 = vmatprep.subr.bf16.mxu0 0
    %1128 = vmatpush1.bf16.xpose.msra.mxu0 0
    %1129 = vmatprep.subr.bf16.mxu0 0
    %1130 = vmatpush1.bf16.xpose.msra.mxu0 0
    %1131 = vmatprep.subr.bf16.mxu0 0
    %1132 = vmatpush1.bf16.xpose.msra.mxu0 0
    %1133 = vmatprep.subr.bf16.mxu0 0
    %1134 = vmatpush1.bf16.xpose.msra.mxu0 0
    %1135 = vmatprep.subr.bf16.mxu0 0
    %1136 = vmatpush1.bf16.xpose.msra.mxu0 0
    %1137 = vmatprep.mubr.bf16.mxu0 0
    %1138 = vmatmul.mubr.bf16.gmra.mrb[0].mxu0 %v1100
    %v1139 = vpop.f32.mrb[0].mxu0
    %v1140 = vadd.f32 %v977, %v1139
    %v1141 = vpop.f32.mrb[0].mxu0
    %v1142 = vpop.f32.mrb[0].mxu0
    %v1143 = vadd.f32 %v978, %v1142
    %v1144 = vpop.f32.mrb[0].mxu0
    %1145 = vdwg.mxu0
    %v1146 = vsel %vm232, %v1140, -inf
    %1147 = vmax.xlane.f32.xlu0 %v1146
    %v1148 = vpop.xlane.xlu0 %1147
    %v1149 = vsel %vm232, %v1143, -inf
    %1150 = vmax.xlane.f32.xlu0 %v1149
    %v1151 = vpop.xlane.xlu0 %1150
    %v1152 = vsub.f32 %v1140, %v1148
    %v1153 = vsub.f32 %v1143, %v1151
    %v1154 = vmul.f32 %v1152, 1.442695
    %v1155 = vpow.pop %v1154
    %v1156 = vmul.f32 %v1153, 1.442695
    %v1157 = vpow.pop %v1156
    %v1158 = vsel %vm232, %v1155, 0.0
    %1159 = vadd.xlane.f32.xlu0 %v1158
    %v1160 = vpop.xlane.xlu0 %1159
    %v1161 = vsel %vm232, %v1157, 0.0
    %1162 = vadd.xlane.f32.xlu0 %v1161
    %v1163 = vpop.xlane.xlu0 %1162
    %v1164 = vrcp.pop %v1160
    %v1165 = vmul.f32 %v1155, %v1164
    %v1166 = vrcp.pop %v1163
    %v1167 = vmul.f32 %v1157, %v1166
    %v1168 = vpack.c.bf16 %v1167, %v1165
    %1169 = vrot.lane.b32.xlu0 %v1095, 64
    %v1170 = vpop.permute.xlu0 %1169
    %v1173 = vsel %vm232, %v1168, 0
    %1175 = vmatprep.subr.bf16.mxu0 0
    %1176 = vmatpush1.bf16.msra.mxu0 %v1170
    %1177 = vmatprep.subr.bf16.mxu0 0
    %1178 = vmatpush1.bf16.msra.mxu0 0
    %1179 = vmatprep.subr.bf16.mxu0 0
    %1180 = vmatpush1.bf16.msra.mxu0 0
    %1181 = vmatprep.subr.bf16.mxu0 0
    %1182 = vmatpush1.bf16.msra.mxu0 0
    %1183 = vmatprep.subr.bf16.mxu0 0
    %1184 = vmatpush1.bf16.msra.mxu0 0
    %1185 = vmatprep.subr.bf16.mxu0 0
    %1186 = vmatpush1.bf16.msra.mxu0 0
    %1187 = vmatprep.subr.bf16.mxu0 0
    %1188 = vmatpush1.bf16.msra.mxu0 0
    %1189 = vmatprep.subr.bf16.mxu0 0
    %1190 = vmatpush1.bf16.msra.mxu0 0
    %1191 = vmatprep.subr.bf16.mxu0 0
    %1192 = vmatpush1.bf16.msra.mxu0 0
    %1193 = vmatprep.subr.bf16.mxu0 0
    %1194 = vmatpush1.bf16.msra.mxu0 0
    %1195 = vmatprep.subr.bf16.mxu0 0
    %1196 = vmatpush1.bf16.msra.mxu0 0
    %1197 = vmatprep.subr.bf16.mxu0 0
    %1198 = vmatpush1.bf16.msra.mxu0 0
    %1199 = vmatprep.subr.bf16.mxu0 0
    %1200 = vmatpush1.bf16.msra.mxu0 0
    %1201 = vmatprep.subr.bf16.mxu0 0
    %1202 = vmatpush1.bf16.msra.mxu0 0
    %1203 = vmatprep.subr.bf16.mxu0 0
    %1204 = vmatpush1.bf16.msra.mxu0 0
    %1205 = vmatprep.subr.bf16.mxu0 0
    %1206 = vmatpush1.bf16.msra.mxu0 0
    %1207 = vmatprep.mubr.bf16.mxu0 0
    %1208 = vmatmul.mubr.bf16.gmra.mrb[0].mxu0 %v1173
    %v1209 = vpop.f32.mrb[0].mxu0
    %v1210 = vadd.f32 0.0, %v1209
    %v1211 = vpop.f32.mrb[0].mxu0
    %v1212 = vpop.f32.mrb[0].mxu0
    %v1213 = vadd.f32 0.0, %v1212
    %v1214 = vpop.f32.mrb[0].mxu0
    %1215 = vdwg.mxu0
    %1216 = vrot.lane.b32.xlu0 %v1095, 120
    %v1217 = vpop.permute.xlu0 %1216
    %1218 = vrot.lane.b32.xlu0 %v1095, 88
    %v1219 = vpop.permute.xlu0 %1218
    %v1221 = vsel %vm184, %v1217, 0
    %v1224 = vsel %vm184, %v1219, 0
    %1226 = vmatprep.subr.bf16.mxu0 0
    %1227 = vmatpush1.bf16.xpose.msra.mxu0 %v1224
    %1228 = vmatprep.subr.bf16.mxu0 0
    %1229 = vmatpush1.bf16.xpose.msra.mxu0 0
    %1230 = vmatprep.subr.bf16.mxu0 0
    %1231 = vmatpush1.bf16.xpose.msra.mxu0 0
    %1232 = vmatprep.subr.bf16.mxu0 0
    %1233 = vmatpush1.bf16.xpose.msra.mxu0 0
    %1234 = vmatprep.subr.bf16.mxu0 0
    %1235 = vmatpush1.bf16.xpose.msra.mxu0 0
    %1236 = vmatprep.subr.bf16.mxu0 0
    %1237 = vmatpush1.bf16.xpose.msra.mxu0 0
    %1238 = vmatprep.subr.bf16.mxu0 0
    %1239 = vmatpush1.bf16.xpose.msra.mxu0 0
    %1240 = vmatprep.subr.bf16.mxu0 0
    %1241 = vmatpush1.bf16.xpose.msra.mxu0 0
    %1242 = vmatprep.subr.bf16.mxu0 0
    %1243 = vmatpush1.bf16.xpose.msra.mxu0 0
    %1244 = vmatprep.subr.bf16.mxu0 0
    %1245 = vmatpush1.bf16.xpose.msra.mxu0 0
    %1246 = vmatprep.subr.bf16.mxu0 0
    %1247 = vmatpush1.bf16.xpose.msra.mxu0 0
    %1248 = vmatprep.subr.bf16.mxu0 0
    %1249 = vmatpush1.bf16.xpose.msra.mxu0 0
    %1250 = vmatprep.subr.bf16.mxu0 0
    %1251 = vmatpush1.bf16.xpose.msra.mxu0 0
    %1252 = vmatprep.subr.bf16.mxu0 0
    %1253 = vmatpush1.bf16.xpose.msra.mxu0 0
    %1254 = vmatprep.subr.bf16.mxu0 0
    %1255 = vmatpush1.bf16.xpose.msra.mxu0 0
    %1256 = vmatprep.subr.bf16.mxu0 0
    %1257 = vmatpush1.bf16.xpose.msra.mxu0 0
    %1258 = vmatprep.mubr.bf16.mxu0 0
    %1259 = vmatmul.mubr.bf16.gmra.mrb[0].mxu0 %v1221
    %v1260 = vpop.f32.mrb[0].mxu0
    %v1261 = vadd.f32 %v977, %v1260
    %v1262 = vpop.f32.mrb[0].mxu0
    %v1263 = vpop.f32.mrb[0].mxu0
    %v1264 = vadd.f32 %v978, %v1263
    %v1265 = vpop.f32.mrb[0].mxu0
    %1266 = vdwg.mxu0
    %v1267 = vsel %vm232, %v1261, -inf
    %1268 = vmax.xlane.f32.xlu0 %v1267
    %v1269 = vpop.xlane.xlu0 %1268
    %v1270 = vsel %vm232, %v1264, -inf
    %1271 = vmax.xlane.f32.xlu0 %v1270
    %v1272 = vpop.xlane.xlu0 %1271
    %v1273 = vsub.f32 %v1261, %v1269
    %v1274 = vsub.f32 %v1264, %v1272
    %v1275 = vmul.f32 %v1273, 1.442695
    %v1276 = vpow.pop %v1275
    %v1277 = vmul.f32 %v1274, 1.442695
    %v1278 = vpow.pop %v1277
    %v1279 = vsel %vm232, %v1276, 0.0
    %1280 = vadd.xlane.f32.xlu0 %v1279
    %v1281 = vpop.xlane.xlu0 %1280
    %v1282 = vsel %vm232, %v1278, 0.0
    %1283 = vadd.xlane.f32.xlu0 %v1282
    %v1284 = vpop.xlane.xlu0 %1283
    %v1285 = vrcp.pop %v1281
    %v1286 = vmul.f32 %v1276, %v1285
    %v1287 = vrcp.pop %v1284
    %v1288 = vmul.f32 %v1278, %v1287
    %v1289 = vpack.c.bf16 %v1288, %v1286
    %1290 = vrot.lane.b32.xlu0 %v1095, 56
    %v1291 = vpop.permute.xlu0 %1290
    %v1294 = vsel %vm232, %v1289, 0
    %1296 = vmatprep.subr.bf16.mxu0 0
    %1297 = vmatpush1.bf16.msra.mxu0 %v1291
    %1298 = vmatprep.subr.bf16.mxu0 0
    %1299 = vmatpush1.bf16.msra.mxu0 0
    %1300 = vmatprep.subr.bf16.mxu0 0
    %1301 = vmatpush1.bf16.msra.mxu0 0
    %1302 = vmatprep.subr.bf16.mxu0 0
    %1303 = vmatpush1.bf16.msra.mxu0 0
    %1304 = vmatprep.subr.bf16.mxu0 0
    %1305 = vmatpush1.bf16.msra.mxu0 0
    %1306 = vmatprep.subr.bf16.mxu0 0
    %1307 = vmatpush1.bf16.msra.mxu0 0
    %1308 = vmatprep.subr.bf16.mxu0 0
    %1309 = vmatpush1.bf16.msra.mxu0 0
    %1310 = vmatprep.subr.bf16.mxu0 0
    %1311 = vmatpush1.bf16.msra.mxu0 0
    %1312 = vmatprep.subr.bf16.mxu0 0
    %1313 = vmatpush1.bf16.msra.mxu0 0
    %1314 = vmatprep.subr.bf16.mxu0 0
    %1315 = vmatpush1.bf16.msra.mxu0 0
    %1316 = vmatprep.subr.bf16.mxu0 0
    %1317 = vmatpush1.bf16.msra.mxu0 0
    %1318 = vmatprep.subr.bf16.mxu0 0
    %1319 = vmatpush1.bf16.msra.mxu0 0
    %1320 = vmatprep.subr.bf16.mxu0 0
    %1321 = vmatpush1.bf16.msra.mxu0 0
    %1322 = vmatprep.subr.bf16.mxu0 0
    %1323 = vmatpush1.bf16.msra.mxu0 0
    %1324 = vmatprep.subr.bf16.mxu0 0
    %1325 = vmatpush1.bf16.msra.mxu0 0
    %1326 = vmatprep.subr.bf16.mxu0 0
    %1327 = vmatpush1.bf16.msra.mxu0 0
    %1328 = vmatprep.mubr.bf16.mxu0 0
    %1329 = vmatmul.mubr.bf16.gmra.mrb[0].mxu0 %v1294
    %v1330 = vpop.f32.mrb[0].mxu0
    %v1331 = vadd.f32 0.0, %v1330
    %v1332 = vpop.f32.mrb[0].mxu0
    %v1333 = vpop.f32.mrb[0].mxu0
    %v1334 = vadd.f32 0.0, %v1333
    %v1335 = vpop.f32.mrb[0].mxu0
    %1336 = vdwg.mxu0
    %1337 = vrot.lane.b32.xlu0 %v1095, 112
    %v1338 = vpop.permute.xlu0 %1337
    %1339 = vrot.lane.b32.xlu0 %v1095, 80
    %v1340 = vpop.permute.xlu0 %1339
    %v1342 = vsel %vm184, %v1338, 0
    %v1345 = vsel %vm184, %v1340, 0
    %1347 = vmatprep.subr.bf16.mxu0 0
    %1348 = vmatpush1.bf16.xpose.msra.mxu0 %v1345
    %1349 = vmatprep.subr.bf16.mxu0 0
    %1350 = vmatpush1.bf16.xpose.msra.mxu0 0
    %1351 = vmatprep.subr.bf16.mxu0 0
    %1352 = vmatpush1.bf16.xpose.msra.mxu0 0
    %1353 = vmatprep.subr.bf16.mxu0 0
    %1354 = vmatpush1.bf16.xpose.msra.mxu0 0
    %1355 = vmatprep.subr.bf16.mxu0 0
    %1356 = vmatpush1.bf16.xpose.msra.mxu0 0
    %1357 = vmatprep.subr.bf16.mxu0 0
    %1358 = vmatpush1.bf16.xpose.msra.mxu0 0
    %1359 = vmatprep.subr.bf16.mxu0 0
    %1360 = vmatpush1.bf16.xpose.msra.mxu0 0
    %1361 = vmatprep.subr.bf16.mxu0 0
    %1362 = vmatpush1.bf16.xpose.msra.mxu0 0
    %1363 = vmatprep.subr.bf16.mxu0 0
    %1364 = vmatpush1.bf16.xpose.msra.mxu0 0
    %1365 = vmatprep.subr.bf16.mxu0 0
    %1366 = vmatpush1.bf16.xpose.msra.mxu0 0
    %1367 = vmatprep.subr.bf16.mxu0 0
    %1368 = vmatpush1.bf16.xpose.msra.mxu0 0
    %1369 = vmatprep.subr.bf16.mxu0 0
    %1370 = vmatpush1.bf16.xpose.msra.mxu0 0
    %1371 = vmatprep.subr.bf16.mxu0 0
    %1372 = vmatpush1.bf16.xpose.msra.mxu0 0
    %1373 = vmatprep.subr.bf16.mxu0 0
    %1374 = vmatpush1.bf16.xpose.msra.mxu0 0
    %1375 = vmatprep.subr.bf16.mxu0 0
    %1376 = vmatpush1.bf16.xpose.msra.mxu0 0
    %1377 = vmatprep.subr.bf16.mxu0 0
    %1378 = vmatpush1.bf16.xpose.msra.mxu0 0
    %1379 = vmatprep.mubr.bf16.mxu0 0
    %1380 = vmatmul.mubr.bf16.gmra.mrb[0].mxu0 %v1342
    %v1381 = vpop.f32.mrb[0].mxu0
    %v1382 = vadd.f32 %v977, %v1381
    %v1383 = vpop.f32.mrb[0].mxu0
    %v1384 = vpop.f32.mrb[0].mxu0
    %v1385 = vadd.f32 %v978, %v1384
    %v1386 = vpop.f32.mrb[0].mxu0
    %1387 = vdwg.mxu0
    %v1388 = vsel %vm232, %v1382, -inf
    %1389 = vmax.xlane.f32.xlu0 %v1388
    %v1390 = vpop.xlane.xlu0 %1389
    %v1391 = vsel %vm232, %v1385, -inf
    %1392 = vmax.xlane.f32.xlu0 %v1391
    %v1393 = vpop.xlane.xlu0 %1392
    %v1394 = vsub.f32 %v1382, %v1390
    %v1395 = vsub.f32 %v1385, %v1393
    %v1396 = vmul.f32 %v1394, 1.442695
    %v1397 = vpow.pop %v1396
    %v1398 = vmul.f32 %v1395, 1.442695
    %v1399 = vpow.pop %v1398
    %v1400 = vsel %vm232, %v1397, 0.0
    %1401 = vadd.xlane.f32.xlu0 %v1400
    %v1402 = vpop.xlane.xlu0 %1401
    %v1403 = vsel %vm232, %v1399, 0.0
    %1404 = vadd.xlane.f32.xlu0 %v1403
    %v1405 = vpop.xlane.xlu0 %1404
    %v1406 = vrcp.pop %v1402
    %v1407 = vmul.f32 %v1397, %v1406
    %v1408 = vrcp.pop %v1405
    %v1409 = vmul.f32 %v1399, %v1408
    %v1410 = vpack.c.bf16 %v1409, %v1407
    %1411 = vrot.lane.b32.xlu0 %v1095, 48
    %v1412 = vpop.permute.xlu0 %1411
    %v1415 = vsel %vm232, %v1410, 0
    %1417 = vmatprep.subr.bf16.mxu0 0
    %1418 = vmatpush1.bf16.msra.mxu0 %v1412
    %1419 = vmatprep.subr.bf16.mxu0 0
    %1420 = vmatpush1.bf16.msra.mxu0 0
    %1421 = vmatprep.subr.bf16.mxu0 0
    %1422 = vmatpush1.bf16.msra.mxu0 0
    %1423 = vmatprep.subr.bf16.mxu0 0
    %1424 = vmatpush1.bf16.msra.mxu0 0
    %1425 = vmatprep.subr.bf16.mxu0 0
    %1426 = vmatpush1.bf16.msra.mxu0 0
    %1427 = vmatprep.subr.bf16.mxu0 0
    %1428 = vmatpush1.bf16.msra.mxu0 0
    %1429 = vmatprep.subr.bf16.mxu0 0
    %1430 = vmatpush1.bf16.msra.mxu0 0
    %1431 = vmatprep.subr.bf16.mxu0 0
    %1432 = vmatpush1.bf16.msra.mxu0 0
    %1433 = vmatprep.subr.bf16.mxu0 0
    %1434 = vmatpush1.bf16.msra.mxu0 0
    %1435 = vmatprep.subr.bf16.mxu0 0
    %1436 = vmatpush1.bf16.msra.mxu0 0
    %1437 = vmatprep.subr.bf16.mxu0 0
    %1438 = vmatpush1.bf16.msra.mxu0 0
    %1439 = vmatprep.subr.bf16.mxu0 0
    %1440 = vmatpush1.bf16.msra.mxu0 0
    %1441 = vmatprep.subr.bf16.mxu0 0
    %1442 = vmatpush1.bf16.msra.mxu0 0
    %1443 = vmatprep.subr.bf16.mxu0 0
    %1444 = vmatpush1.bf16.msra.mxu0 0
    %1445 = vmatprep.subr.bf16.mxu0 0
    %1446 = vmatpush1.bf16.msra.mxu0 0
    %1447 = vmatprep.subr.bf16.mxu0 0
    %1448 = vmatpush1.bf16.msra.mxu0 0
    %1449 = vmatprep.mubr.bf16.mxu0 0
    %1450 = vmatmul.mubr.bf16.gmra.mrb[0].mxu0 %v1415
    %v1451 = vpop.f32.mrb[0].mxu0
    %v1452 = vadd.f32 0.0, %v1451
    %v1453 = vpop.f32.mrb[0].mxu0
    %v1454 = vpop.f32.mrb[0].mxu0
    %v1455 = vadd.f32 0.0, %v1454
    %v1456 = vpop.f32.mrb[0].mxu0
    %1457 = vdwg.mxu0
    %1458 = vrot.lane.b32.xlu0 %v1095, 104
    %v1459 = vpop.permute.xlu0 %1458
    %1460 = vrot.lane.b32.xlu0 %v1095, 72
    %v1461 = vpop.permute.xlu0 %1460
    %v1463 = vsel %vm184, %v1459, 0
    %v1466 = vsel %vm184, %v1461, 0
    %1468 = vmatprep.subr.bf16.mxu0 0
    %1469 = vmatpush1.bf16.xpose.msra.mxu0 %v1466
    %1470 = vmatprep.subr.bf16.mxu0 0
    %1471 = vmatpush1.bf16.xpose.msra.mxu0 0
    %1472 = vmatprep.subr.bf16.mxu0 0
    %1473 = vmatpush1.bf16.xpose.msra.mxu0 0
    %1474 = vmatprep.subr.bf16.mxu0 0
    %1475 = vmatpush1.bf16.xpose.msra.mxu0 0
    %1476 = vmatprep.subr.bf16.mxu0 0
    %1477 = vmatpush1.bf16.xpose.msra.mxu0 0
    %1478 = vmatprep.subr.bf16.mxu0 0
    %1479 = vmatpush1.bf16.xpose.msra.mxu0 0
    %1480 = vmatprep.subr.bf16.mxu0 0
    %1481 = vmatpush1.bf16.xpose.msra.mxu0 0
    %1482 = vmatprep.subr.bf16.mxu0 0
    %1483 = vmatpush1.bf16.xpose.msra.mxu0 0
    %1484 = vmatprep.subr.bf16.mxu0 0
    %1485 = vmatpush1.bf16.xpose.msra.mxu0 0
    %1486 = vmatprep.subr.bf16.mxu0 0
    %1487 = vmatpush1.bf16.xpose.msra.mxu0 0
    %1488 = vmatprep.subr.bf16.mxu0 0
    %1489 = vmatpush1.bf16.xpose.msra.mxu0 0
    %1490 = vmatprep.subr.bf16.mxu0 0
    %1491 = vmatpush1.bf16.xpose.msra.mxu0 0
    %1492 = vmatprep.subr.bf16.mxu0 0
    %1493 = vmatpush1.bf16.xpose.msra.mxu0 0
    %1494 = vmatprep.subr.bf16.mxu0 0
    %1495 = vmatpush1.bf16.xpose.msra.mxu0 0
    %1496 = vmatprep.subr.bf16.mxu0 0
    %1497 = vmatpush1.bf16.xpose.msra.mxu0 0
    %1498 = vmatprep.subr.bf16.mxu0 0
    %1499 = vmatpush1.bf16.xpose.msra.mxu0 0
    %1500 = vmatprep.mubr.bf16.mxu0 0
    %1501 = vmatmul.mubr.bf16.gmra.mrb[0].mxu0 %v1463
    %v1502 = vpop.f32.mrb[0].mxu0
    %v1503 = vadd.f32 %v977, %v1502
    %v1504 = vpop.f32.mrb[0].mxu0
    %v1505 = vpop.f32.mrb[0].mxu0
    %v1506 = vadd.f32 %v978, %v1505
    %v1507 = vpop.f32.mrb[0].mxu0
    %1508 = vdwg.mxu0
    %v1509 = vsel %vm232, %v1503, -inf
    %1510 = vmax.xlane.f32.xlu0 %v1509
    %v1511 = vpop.xlane.xlu0 %1510
    %v1512 = vsel %vm232, %v1506, -inf
    %1513 = vmax.xlane.f32.xlu0 %v1512
    %v1514 = vpop.xlane.xlu0 %1513
    %v1515 = vsub.f32 %v1503, %v1511
    %v1516 = vsub.f32 %v1506, %v1514
    %v1517 = vmul.f32 %v1515, 1.442695
    %v1518 = vpow.pop %v1517
    %v1519 = vmul.f32 %v1516, 1.442695
    %v1520 = vpow.pop %v1519
    %v1521 = vsel %vm232, %v1518, 0.0
    %1522 = vadd.xlane.f32.xlu0 %v1521
    %v1523 = vpop.xlane.xlu0 %1522
    %v1524 = vsel %vm232, %v1520, 0.0
    %1525 = vadd.xlane.f32.xlu0 %v1524
    %v1526 = vpop.xlane.xlu0 %1525
    %v1527 = vrcp.pop %v1523
    %v1528 = vmul.f32 %v1518, %v1527
    %v1529 = vrcp.pop %v1526
    %v1530 = vmul.f32 %v1520, %v1529
    %v1531 = vpack.c.bf16 %v1530, %v1528
    %1532 = vrot.lane.b32.xlu0 %v1095, 40
    %v1533 = vpop.permute.xlu0 %1532
    %v1536 = vsel %vm232, %v1531, 0
    %1538 = vmatprep.subr.bf16.mxu0 0
    %1539 = vmatpush1.bf16.msra.mxu0 %v1533
    %1540 = vmatprep.subr.bf16.mxu0 0
    %1541 = vmatpush1.bf16.msra.mxu0 0
    %1542 = vmatprep.subr.bf16.mxu0 0
    %1543 = vmatpush1.bf16.msra.mxu0 0
    %1544 = vmatprep.subr.bf16.mxu0 0
    %1545 = vmatpush1.bf16.msra.mxu0 0
    %1546 = vmatprep.subr.bf16.mxu0 0
    %1547 = vmatpush1.bf16.msra.mxu0 0
    %1548 = vmatprep.subr.bf16.mxu0 0
    %1549 = vmatpush1.bf16.msra.mxu0 0
    %1550 = vmatprep.subr.bf16.mxu0 0
    %1551 = vmatpush1.bf16.msra.mxu0 0
    %1552 = vmatprep.subr.bf16.mxu0 0
    %1553 = vmatpush1.bf16.msra.mxu0 0
    %1554 = vmatprep.subr.bf16.mxu0 0
    %1555 = vmatpush1.bf16.msra.mxu0 0
    %1556 = vmatprep.subr.bf16.mxu0 0
    %1557 = vmatpush1.bf16.msra.mxu0 0
    %1558 = vmatprep.subr.bf16.mxu0 0
    %1559 = vmatpush1.bf16.msra.mxu0 0
    %1560 = vmatprep.subr.bf16.mxu0 0
    %1561 = vmatpush1.bf16.msra.mxu0 0
    %1562 = vmatprep.subr.bf16.mxu0 0
    %1563 = vmatpush1.bf16.msra.mxu0 0
    %1564 = vmatprep.subr.bf16.mxu0 0
    %1565 = vmatpush1.bf16.msra.mxu0 0
    %1566 = vmatprep.subr.bf16.mxu0 0
    %1567 = vmatpush1.bf16.msra.mxu0 0
    %1568 = vmatprep.subr.bf16.mxu0 0
    %1569 = vmatpush1.bf16.msra.mxu0 0
    %1570 = vmatprep.mubr.bf16.mxu0 0
    %1571 = vmatmul.mubr.bf16.gmra.mrb[0].mxu0 %v1536
    %v1572 = vpop.f32.mrb[0].mxu0
    %v1573 = vadd.f32 0.0, %v1572
    %v1574 = vpop.f32.mrb[0].mxu0
    %v1575 = vpop.f32.mrb[0].mxu0
    %v1576 = vadd.f32 0.0, %v1575
    %v1577 = vpop.f32.mrb[0].mxu0
    %1578 = vdwg.mxu0
    %1581 = vrot.lane.b32.xlu0 %v1331, 8
    %v1582 = vpop.permute.xlu0 %1581
    %1583 = vrot.lane.b32.xlu0 %v1334, 8
    %v1584 = vpop.permute.xlu0 %1583
    %1589 = vrot.lane.b32.xlu0 %v1452, 16
    %v1590 = vpop.permute.xlu0 %1589
    %1591 = vrot.lane.b32.xlu0 %v1455, 16
    %v1592 = vpop.permute.xlu0 %1591
    %1597 = vrot.lane.b32.xlu0 %v1573, 24
    %v1598 = vpop.permute.xlu0 %1597
    %1599 = vrot.lane.b32.xlu0 %v1576, 24
    %v1600 = vpop.permute.xlu0 %1599
    %v1603 = vsel %vm184, %v1210, %v1582
    %v1604 = vsel %vm184, %v1213, %v1584
    %v1605 = vsel %vm232, %v1603, %v1590
    %v1606 = vsel %vm232, %v1604, %v1592
    %v1607 = vsel %vm694, %v1605, %v1598
    %v1608 = vsel %vm694, %v1606, %v1600
    %v1609 = vpack.c.bf16 %v1608, %v1607
    %s1610 = scalar_lea.vmem %s7, 16
    %v1611 = vld [vmem:[%s1610] sm:$0xf]
    %v1612 = vld [vmem:[%s1610 + $0x4] sm:$0xf]
    %v1613 = vld [vmem:[%s1610 + $0x8] sm:$0xf]
    %v1614 = vld [vmem:[%s1610 + $0xc] sm:$0xf]
    %s1615 = scalar_lea.vmem %s8, 1
    %v1616 = vld [vmem:[%s1615] sm:$0x1]
    %v1618 = vlaneseq
    %v1619 = vshrl.u32 %v1618, 7
    %v1620 = vsub.s32 0, %v1619
    %v1621 = vrot.slane %v1616, %v1620
    %v1627 = vunpack.c.l.b16 %v1611
    %v1628 = vunpack.c.l.b16 %v1612
    %v1629 = vunpack.c.l.b16 %v1613
    %v1630 = vunpack.c.l.b16 %v1614
    %v1631 = vpack.c.b16 %v1628, %v1627
    %v1632 = vpack.c.b16 %v1630, %v1629
    %v1636 = vsel %vm68, %v1609, 0
    %1638 = vmatprep.subr.bf16.mxu0 0
    %1639 = vmatpush1.bf16.msra.mxu0 %v1631
    %1640 = vmatprep.subr.bf16.mxu0 0
    %1641 = vmatpush1.bf16.msra.mxu0 %v1632
    %1642 = vmatprep.subr.bf16.mxu0 0
    %1643 = vmatpush1.bf16.msra.mxu0 0
    %1644 = vmatprep.subr.bf16.mxu0 0
    %1645 = vmatpush1.bf16.msra.mxu0 0
    %1646 = vmatprep.subr.bf16.mxu0 0
    %1647 = vmatpush1.bf16.msra.mxu0 0
    %1648 = vmatprep.subr.bf16.mxu0 0
    %1649 = vmatpush1.bf16.msra.mxu0 0
    %1650 = vmatprep.subr.bf16.mxu0 0
    %1651 = vmatpush1.bf16.msra.mxu0 0
    %1652 = vmatprep.subr.bf16.mxu0 0
    %1653 = vmatpush1.bf16.msra.mxu0 0
    %1654 = vmatprep.subr.bf16.mxu0 0
    %1655 = vmatpush1.bf16.msra.mxu0 0
    %1656 = vmatprep.subr.bf16.mxu0 0
    %1657 = vmatpush1.bf16.msra.mxu0 0
    %1658 = vmatprep.subr.bf16.mxu0 0
    %1659 = vmatpush1.bf16.msra.mxu0 0
    %1660 = vmatprep.subr.bf16.mxu0 0
    %1661 = vmatpush1.bf16.msra.mxu0 0
    %1662 = vmatprep.subr.bf16.mxu0 0
    %1663 = vmatpush1.bf16.msra.mxu0 0
    %1664 = vmatprep.subr.bf16.mxu0 0
    %1665 = vmatpush1.bf16.msra.mxu0 0
    %1666 = vmatprep.subr.bf16.mxu0 0
    %1667 = vmatpush1.bf16.msra.mxu0 0
    %1668 = vmatprep.subr.bf16.mxu0 0
    %1669 = vmatpush1.bf16.msra.mxu0 0
    %1670 = vmatprep.mubr.bf16.mxu0 0
    %1671 = vmatmul.mubr.bf16.gmra.mrb[0].mxu0 %v1636
    %v1672 = vpop.f32.mrb[0].mxu0
    %v1673 = vadd.f32 %v1621, %v1672
    %v1674 = vpop.f32.mrb[0].mxu0
    %v1675 = vpop.f32.mrb[0].mxu0
    %v1676 = vadd.f32 %v1621, %v1675
    %v1677 = vpop.f32.mrb[0].mxu0
    %1678 = vdwg.mxu0
    %v1679 = vadd.f32 %v974, %v1673
    %v1680 = vadd.f32 %v975, %v1676
    %s1681 = scalar_lea.vmem %s9, 1
    %v1682 = vld [vmem:[%s1681] sm:$0x1]
    %s1683 = scalar_lea.vmem %s10, 1
    %v1684 = vld [vmem:[%s1683] sm:$0x1]
    %v1685 = vsel %vm68, %v1679, 0.0
    %1686 = vadd.xlane.f32.xlu0 %v1685
    %v1687 = vpop.xlane.xlu0 %1686
    %v1688 = vsel %vm68, %v1680, 0.0
    %1689 = vadd.xlane.f32.xlu0 %v1688
    %v1690 = vpop.xlane.xlu0 %1689
    %v1691 = vmul.f32 %v1687, %v75
    %v1692 = vmul.f32 %v1690, %v75
    %v1693 = vsub.f32 %v1679, %v1691
    %v1694 = vsub.f32 %v1680, %v1692
    %v1695 = vmul.f32 %v1693, %v1693
    %v1696 = vmul.f32 %v1694, %v1694
    %v1697 = vsel %vm68, %v1695, 0.0
    %1698 = vadd.xlane.f32.xlu0 %v1697
    %v1699 = vpop.xlane.xlu0 %1698
    %v1700 = vsel %vm68, %v1696, 0.0
    %1701 = vadd.xlane.f32.xlu0 %v1700
    %v1702 = vpop.xlane.xlu0 %1701
    %v1703 = vmul.f32 %v1699, %v75
    %v1704 = vmul.f32 %v1702, %v75
    %v1705 = vadd.f32 %v1703, 1e-06
    %v1706 = vadd.f32 %v1704, 1e-06
    %v1707 = vrsqrt.pop %v1705
    %v1708 = vrsqrt.pop %v1706
    %v1709 = vmul.f32 %v1693, %v1707
    %v1710 = vmul.f32 %v1694, %v1708
    %v1712 = vlaneseq
    %v1713 = vshrl.u32 %v1712, 7
    %v1714 = vsub.s32 0, %v1713
    %v1715 = vrot.slane %v1682, %v1714
    %v1717 = vmul.f32 %v1709, %v1715
    %v1718 = vmul.f32 %v1710, %v1715
    %v1720 = vlaneseq
    %v1721 = vshrl.u32 %v1720, 7
    %v1722 = vsub.s32 0, %v1721
    %v1723 = vrot.slane %v1684, %v1722
    %v1725 = vadd.f32 %v1717, %v1723
    %v1726 = vadd.f32 %v1718, %v1723
    %v1727 = vpack.c.bf16 %v1726, %v1725
    %s1728 = scalar_lea.vmem %s11, 16
    %v1729 = vld [vmem:[%s1728] sm:$0xf]
    %v1730 = vld [vmem:[%s1728 + $0x4] sm:$0xf]
    %v1731 = vld [vmem:[%s1728 + $0x8] sm:$0xf]
    %v1732 = vld [vmem:[%s1728 + $0xc] sm:$0xf]
    %s1733 = scalar_lea.vmem %s12, 1
    %v1734 = vld [vmem:[%s1733] sm:$0x1]
    %v1736 = vlaneseq
    %v1737 = vshrl.u32 %v1736, 7
    %v1738 = vsub.s32 0, %v1737
    %v1739 = vrot.slane %v1734, %v1738
    %v1745 = vunpack.c.l.b16 %v1729
    %v1746 = vunpack.c.l.b16 %v1730
    %v1747 = vunpack.c.l.b16 %v1731
    %v1748 = vunpack.c.l.b16 %v1732
    %v1749 = vpack.c.b16 %v1746, %v1745
    %v1750 = vpack.c.b16 %v1748, %v1747
    %v1754 = vsel %vm68, %v1727, 0
    %1756 = vmatprep.subr.bf16.mxu0 0
    %1757 = vmatpush1.bf16.msra.mxu0 %v1749
    %1758 = vmatprep.subr.bf16.mxu0 0
    %1759 = vmatpush1.bf16.msra.mxu0 %v1750
    %1760 = vmatprep.subr.bf16.mxu0 0
    %1761 = vmatpush1.bf16.msra.mxu0 0
    %1762 = vmatprep.subr.bf16.mxu0 0
    %1763 = vmatpush1.bf16.msra.mxu0 0
    %1764 = vmatprep.subr.bf16.mxu0 0
    %1765 = vmatpush1.bf16.msra.mxu0 0
    %1766 = vmatprep.subr.bf16.mxu0 0
    %1767 = vmatpush1.bf16.msra.mxu0 0
    %1768 = vmatprep.subr.bf16.mxu0 0
    %1769 = vmatpush1.bf16.msra.mxu0 0
    %1770 = vmatprep.subr.bf16.mxu0 0
    %1771 = vmatpush1.bf16.msra.mxu0 0
    %1772 = vmatprep.subr.bf16.mxu0 0
    %1773 = vmatpush1.bf16.msra.mxu0 0
    %1774 = vmatprep.subr.bf16.mxu0 0
    %1775 = vmatpush1.bf16.msra.mxu0 0
    %1776 = vmatprep.subr.bf16.mxu0 0
    %1777 = vmatpush1.bf16.msra.mxu0 0
    %1778 = vmatprep.subr.bf16.mxu0 0
    %1779 = vmatpush1.bf16.msra.mxu0 0
    %1780 = vmatprep.subr.bf16.mxu0 0
    %1781 = vmatpush1.bf16.msra.mxu0 0
    %1782 = vmatprep.subr.bf16.mxu0 0
    %1783 = vmatpush1.bf16.msra.mxu0 0
    %1784 = vmatprep.subr.bf16.mxu0 0
    %1785 = vmatpush1.bf16.msra.mxu0 0
    %1786 = vmatprep.subr.bf16.mxu0 0
    %1787 = vmatpush1.bf16.msra.mxu0 0
    %1788 = vmatprep.mubr.bf16.mxu0 0
    %1789 = vmatmul.mubr.bf16.gmra.mrb[0].mxu0 %v1754
    %v1790 = vpop.f32.mrb[0].mxu0
    %v1791 = vadd.f32 %v1739, %v1790
    %v1792 = vpop.f32.mrb[0].mxu0
    %v1793 = vpop.f32.mrb[0].mxu0
    %v1794 = vadd.f32 %v1739, %v1793
    %v1795 = vpop.f32.mrb[0].mxu0
    %1796 = vdwg.mxu0
    %v1797 = vmul.f32 %v1791, 0.5
    %v1798 = vmul.f32 %v1794, 0.5
    %v1799 = vmul.f32 %v1791, 0.70710677
    %v1800 = vmul.f32 %v1794, 0.70710677
    %v1801 = verf.f32.pop %v1799
    %v1802 = verf.f32.pop %v1800
    %v1803 = vadd.f32 %v1801, 1.0
    %v1804 = vadd.f32 %v1802, 1.0
    %v1805 = vmul.f32 %v1797, %v1803
    %v1806 = vmul.f32 %v1798, %v1804
    %v1807 = vpack.c.bf16 %v1806, %v1805
    %s1808 = scalar_lea.vmem %s13, 32
    %v1809 = vld [vmem:[%s1808] sm:$0xf]
    %v1810 = vld [vmem:[%s1808 + $0x4] sm:$0xf]
    %v1811 = vld [vmem:[%s1808 + $0x8] sm:$0xf]
    %v1812 = vld [vmem:[%s1808 + $0xc] sm:$0xf]
    %v1813 = vld [vmem:[%s1808 + $0x10] sm:$0xf]
    %v1814 = vld [vmem:[%s1808 + $0x14] sm:$0xf]
    %v1815 = vld [vmem:[%s1808 + $0x18] sm:$0xf]
    %v1816 = vld [vmem:[%s1808 + $0x1c] sm:$0xf]
    %s1817 = scalar_lea.vmem %s14, 1
    %v1818 = vld [vmem:[%s1817] sm:$0x1]
    %v1820 = vlaneseq
    %v1821 = vshrl.u32 %v1820, 7
    %v1822 = vsub.s32 0, %v1821
    %v1823 = vrot.slane %v1818, %v1822
    %v1833 = vunpack.c.l.b16 %v1809
    %v1834 = vunpack.c.l.b16 %v1810
    %v1835 = vunpack.c.l.b16 %v1811
    %v1836 = vunpack.c.l.b16 %v1812
    %v1837 = vunpack.c.l.b16 %v1813
    %v1838 = vunpack.c.l.b16 %v1814
    %v1839 = vunpack.c.l.b16 %v1815
    %v1840 = vunpack.c.l.b16 %v1816
    %v1841 = vpack.c.b16 %v1834, %v1833
    %v1842 = vpack.c.b16 %v1836, %v1835
    %v1843 = vpack.c.b16 %v1838, %v1837
    %v1844 = vpack.c.b16 %v1840, %v1839
    %v1850 = vsel %vm929, %v1807, 0
    %1852 = vmatprep.subr.bf16.mxu0 0
    %1853 = vmatpush1.bf16.msra.mxu0 %v1841
    %1854 = vmatprep.subr.bf16.mxu0 0
    %1855 = vmatpush1.bf16.msra.mxu0 %v1842
    %1856 = vmatprep.subr.bf16.mxu0 0
    %1857 = vmatpush1.bf16.msra.mxu0 %v1843
    %1858 = vmatprep.subr.bf16.mxu0 0
    %1859 = vmatpush1.bf16.msra.mxu0 %v1844
    %1860 = vmatprep.subr.bf16.mxu0 0
    %1861 = vmatpush1.bf16.msra.mxu0 0
    %1862 = vmatprep.subr.bf16.mxu0 0
    %1863 = vmatpush1.bf16.msra.mxu0 0
    %1864 = vmatprep.subr.bf16.mxu0 0
    %1865 = vmatpush1.bf16.msra.mxu0 0
    %1866 = vmatprep.subr.bf16.mxu0 0
    %1867 = vmatpush1.bf16.msra.mxu0 0
    %1868 = vmatprep.subr.bf16.mxu0 0
    %1869 = vmatpush1.bf16.msra.mxu0 0
    %1870 = vmatprep.subr.bf16.mxu0 0
    %1871 = vmatpush1.bf16.msra.mxu0 0
    %1872 = vmatprep.subr.bf16.mxu0 0
    %1873 = vmatpush1.bf16.msra.mxu0 0
    %1874 = vmatprep.subr.bf16.mxu0 0
    %1875 = vmatpush1.bf16.msra.mxu0 0
    %1876 = vmatprep.subr.bf16.mxu0 0
    %1877 = vmatpush1.bf16.msra.mxu0 0
    %1878 = vmatprep.subr.bf16.mxu0 0
    %1879 = vmatpush1.bf16.msra.mxu0 0
    %1880 = vmatprep.subr.bf16.mxu0 0
    %1881 = vmatpush1.bf16.msra.mxu0 0
    %1882 = vmatprep.subr.bf16.mxu0 0
    %1883 = vmatpush1.bf16.msra.mxu0 0
    %1884 = vmatprep.mubr.bf16.mxu0 0
    %1885 = vmatmul.mubr.bf16.gmra.mrb[0].mxu0 %v1850
    %v1886 = vpop.f32.mrb[0].mxu0
    %v1887 = vadd.f32 %v1823, %v1886
    %v1888 = vpop.f32.mrb[0].mxu0
    %v1889 = vpop.f32.mrb[0].mxu0
    %v1890 = vadd.f32 %v1823, %v1889
    %v1891 = vpop.f32.mrb[0].mxu0
    %1892 = vdwg.mxu0
    %v1893 = vadd.f32 %v1679, %v1887
    %v1894 = vadd.f32 %v1680, %v1890
    %v1895 = vld [vmem:[%s15] sm:$0x1]
    %v1896 = vld [vmem:[%s16] sm:$0x1]
    %v1897 = vsel %vm68, %v1893, 0.0
    %1898 = vadd.xlane.f32.xlu0 %v1897
    %v1899 = vpop.xlane.xlu0 %1898
    %v1900 = vsel %vm68, %v1894, 0.0
    %1901 = vadd.xlane.f32.xlu0 %v1900
    %v1902 = vpop.xlane.xlu0 %1901
    %v1903 = vmul.f32 %v1899, %v75
    %v1904 = vmul.f32 %v1902, %v75
    %v1905 = vsub.f32 %v1893, %v1903
    %v1906 = vsub.f32 %v1894, %v1904
    %v1907 = vmul.f32 %v1905, %v1905
    %v1908 = vmul.f32 %v1906, %v1906
    %v1909 = vsel %vm68, %v1907, 0.0
    %1910 = vadd.xlane.f32.xlu0 %v1909
    %v1911 = vpop.xlane.xlu0 %1910
    %v1912 = vsel %vm68, %v1908, 0.0
    %1913 = vadd.xlane.f32.xlu0 %v1912
    %v1914 = vpop.xlane.xlu0 %1913
    %v1915 = vmul.f32 %v1911, %v75
    %v1916 = vmul.f32 %v1914, %v75
    %v1917 = vadd.f32 %v1915, 1e-06
    %v1918 = vadd.f32 %v1916, 1e-06
    %v1919 = vrsqrt.pop %v1917
    %v1920 = vrsqrt.pop %v1918
    %v1921 = vmul.f32 %v1905, %v1919
    %v1922 = vmul.f32 %v1906, %v1920
    %v1924 = vlaneseq
    %v1925 = vshrl.u32 %v1924, 7
    %v1926 = vsub.s32 0, %v1925
    %v1927 = vrot.slane %v1895, %v1926
    %v1929 = vmul.f32 %v1921, %v1927
    %v1930 = vmul.f32 %v1922, %v1927
    %v1932 = vlaneseq
    %v1933 = vshrl.u32 %v1932, 7
    %v1934 = vsub.s32 0, %v1933
    %v1935 = vrot.slane %v1896, %v1934
    %v1937 = vadd.f32 %v1929, %v1935
    %v1938 = vadd.f32 %v1930, %v1935
    %1939 = vst.msk [vmem:[#allocation2] sm:$0xff] %vm68, %v1937
    %1940 = vst.msk [vmem:[#allocation2 + $0x8] sm:$0xff] %vm68, %v1938
    // Predicated region
    $region70: #{_encoder_forward.1} parent=1 // pred_check
      _
    $region71: #{_encoder_forward.1} parent=1 // pred_check_branch
      %1942 = sbr.rel (0) target = $region73
    $region72: #{_encoder_forward.1} parent=1 // pred_region
      %s1944 = ssub.s32 256, 256
      %1945 = vsyncadd [#allocation3], %s1944
      %s1946 = sshll.u32 [#allocation2], 4
      %s1947 = int_to_ptr.vmem [resolvable:$true] %s1946
      %1952 = dma.vmem_to_hbm [thread:$0]  %s1947, 256, %s17, [#allocation3], 128, 128, 8
    $region73: #{_encoder_forward.1} parent=1 // pred_fallthru
      _
    // Predicated region
    $region74: #{_encoder_forward.1} parent=1 // pred_check
      _
    $region75: #{_encoder_forward.1} parent=1 // pred_check_branch
      %1954 = sbr.rel (0) target = $region77
    $region76: #{_encoder_forward.1} parent=1 // pred_region
      %1955 = dma.done [#allocation3], 256
    $region77: #{_encoder_forward.1} parent=1 // pred_fallthru
      _
    %1956 = vsyncpa [#allocation3], 1

</llo_original>
